<compile_context>
chip_gen: v7x
topology: tpu7x:2x2x1
jax: 0.10.0
libtpu: 0.0.40
codegen_flags: <defaults>
</compile_context>

<pallas_src>
import math
from functools import partial

import numpy as np
import jax
import jax.numpy as jnp
from jax import lax
from jax.experimental import pallas as pl
from jax.experimental.pallas import tpu as pltpu

HIDDEN_SIZE = 64
NUM_FEATURES = 2
NUM_LAYERS = 2
PROJ_SIZE = 2


def _lstm_kernel(x_ref, w_ih0_ref, b0_ref, w_fused_ref, b1_ref,
                 out_ref, gx0_scr, *, T, Bp):
    # x_ref:       (T*Bp, F)  f32
    # w_ih0_ref:   (F, 4H)    f32   (gate order i,f,o,g; i/f/o cols pre-scaled 0.5)
    # b0_ref:      (1, 4H)    f32   (same reorder/pre-scale)
    # w_fused_ref: (2H, 8H)   bf16  rows 0:H -> h0 (w_hh0_fold | w_ih1_fold)
    #                               rows H:2H -> h1 (0          | w_hh1_fold)
    # b1_ref:      (Bp, 4H)   f32   pre-tiled layer-1 bias
    # out_ref:     (T*Bp, 2H) f32   per step stores [h0_{t+1} | h1_t] (lane-dense)
    # gx0_scr:     (T*Bp, 4H) f32   hoisted layer-0 input gates
    H = HIDDEN_SIZE
    H3, H4 = 3 * H, 4 * H

    # ---- hoisted non-recurrent work: layer-0 input gates (+ bias) for all (t, b)
    gx0_scr[...] = (jnp.dot(x_ref[...], w_ih0_ref[...],
                            preferred_element_type=jnp.float32) + b0_ref[...])

    b1 = b1_ref[...]                                   # loop-invariant, 2 vregs

    def _act(g, c):
        # Gate order (i, f, o, g); i/f/o pre-activations already halved in the
        # weights, so sigmoid(z) = 0.5*tanh(z/2) + 0.5 costs a single tanh.
        t = jnp.tanh(g)                                # one EUP op for all 4 gates
        ifo = t[:, :H3] * 0.5 + 0.5                    # i, f, o (VPU filler)
        c_new = ifo[:, H:2 * H] * c + ifo[:, :H] * t[:, H3:]
        h_new = ifo[:, 2 * H:H3] * jnp.tanh(c_new)
        return h_new, c_new

    zeros = jnp.zeros((Bp, H), jnp.float32)

    # ---- wavefront prologue (iteration 0): layer-0 step 0; h0 = h1 = 0 -> no matmul
    h0, c0 = _act(gx0_scr[pl.ds(0, Bp), :], zeros)
    hcat = jnp.concatenate([h0, zeros], axis=1)        # [h0_0 | h1_{-1}=0], (Bp, 2H)
    c1 = zeros

    # ---- steady state: iteration k = layer-0 step k  +  layer-1 step k-1,
    #      both halves from ONE (Bp,128)@(128,512) bf16 MXU call.
    def step(k, carry):
        hcat, c0, c1 = carry
        g = jnp.dot(hcat.astype(jnp.bfloat16), w_fused_ref[...],
                    preferred_element_type=jnp.float32)            # (Bp, 8H)
        off_in = pl.multiple_of(k * Bp, Bp)
        h0n, c0n = _act(g[:, :H4] + gx0_scr[pl.ds(off_in, Bp), :], c0)
        h1n, c1n = _act(g[:, H4:] + b1, c1)
        hcat_new = jnp.concatenate([h0n, h1n], axis=1)             # 128 lanes
        off_out = pl.multiple_of((k - 1) * Bp, Bp)
        out_ref[pl.ds(off_out, Bp), :] = hcat_new                  # full unmasked vst
        return hcat_new, c0n, c1n

    hcat, c0, c1 = lax.fori_loop(1, T, step, (hcat, c0, c1), unroll=True)

    # ---- wavefront epilogue (iteration T): layer-1 step T-1 only
    g1 = jnp.dot(hcat.astype(jnp.bfloat16), w_fused_ref[:, H4:],
                 preferred_element_type=jnp.float32) + b1
    h1n, _ = _act(g1, c1)
    out_ref[pl.ds((T - 1) * Bp, Bp), :] = jnp.concatenate([hcat[:, :H], h1n], axis=1)


def init_params(key):
    # Same shapes/init range as torch.nn.LSTM(2, 64, 2, proj_size=2), stored
    # transposed for row-vector matmuls, PyTorch gate order (i, f, g, o).
    # b = b_ih + b_hh (they only ever sum). Layer-1 input size == PROJ_SIZE == 2.
    stdv = 1.0 / math.sqrt(HIDDEN_SIZE)
    keys = jax.random.split(key, 5)
    u = lambda k, shape: jax.random.uniform(k, shape, jnp.float32, -stdv, stdv)
    w_ih = u(keys[0], (NUM_LAYERS, NUM_FEATURES, 4 * HIDDEN_SIZE))
    w_hh = u(keys[1], (NUM_LAYERS, PROJ_SIZE, 4 * HIDDEN_SIZE))
    b_ih = u(keys[2], (NUM_LAYERS, 1, 4 * HIDDEN_SIZE))
    b_hh = u(keys[3], (NUM_LAYERS, 1, 4 * HIDDEN_SIZE))
    w_hr = u(keys[4], (NUM_LAYERS, HIDDEN_SIZE, PROJ_SIZE))
    return w_ih, w_hh, b_ih + b_hh, w_hr


def _reorder_prescale(w):
    # PyTorch gate order (i, f, g, o) -> kernel order (i, f, o, g) on the 4H
    # axis, with the i/f/o columns scaled by 0.5 (folds the sigmoid-via-tanh
    # pre-scale into the weights so the kernel pays zero extra VPU ops).
    H = HIDDEN_SIZE
    i, f, g, o = w[..., :H], w[..., H:2 * H], w[..., 2 * H:3 * H], w[..., 3 * H:]
    return jnp.concatenate([0.5 * i, 0.5 * f, 0.5 * o, g], axis=-1)


def _prepare_kernel_params(params, Bp):
    """One-time pure-JAX prep: fold projections, reorder/pre-scale gates, fuse weights."""
    w_ih, w_hh, b, w_hr = params
    w_ih0 = _reorder_prescale(w_ih[0])                        # (F, 4H)
    b0 = _reorder_prescale(b[0])                              # (1, 4H)
    b1 = _reorder_prescale(b[1])                              # (1, 4H)
    # Fold each layer's hidden projection into the matmuls that consume the
    # projected state, so the loop only carries the raw (Bp, H) states.
    w_hh0_f = _reorder_prescale(jnp.dot(w_hr[0], w_hh[0]))    # (H, 4H)
    w_ih1_f = _reorder_prescale(jnp.dot(w_hr[0], w_ih[1]))    # (H, 4H)
    w_hh1_f = _reorder_prescale(jnp.dot(w_hr[1], w_hh[1]))    # (H, 4H)
    # Block weight for the single per-step wavefront matmul: [h0 | h1] @ W.
    top = jnp.concatenate([w_hh0_f, w_ih1_f], axis=1)         # (H, 8H)
    bot = jnp.concatenate([jnp.zeros_like(w_hh1_f), w_hh1_f], axis=1)
    w_fused = jnp.concatenate([top, bot], axis=0).astype(jnp.bfloat16)  # (2H, 8H)
    b1_tiled = jnp.tile(b1, (Bp, 1)).astype(jnp.float32)      # (Bp, 4H), no in-loop bcast
    return w_ih0, b0, w_fused, b1_tiled, w_hr[1]


def lstm_forward(x, lengths, params):
    """x: (B, T, NUM_FEATURES) batch-first. Returns (output (B, max(lengths), 2), lengths)."""
    lengths_np = np.asarray(lengths)
    t_out = int(lengths_np.max())          # pad_packed_sequence returns max(lengths) steps
    B = x.shape[0]
    Bp = ((B + 7) // 8) * 8                # pad batch to a full 8-sublane group

    # time-major, batch-padded, flattened to (T*Bp, F): all in-kernel accesses 2-D
    x_tm = jnp.transpose(x[:, :t_out, :], (1, 0, 2)).astype(jnp.float32)   # (T, B, F)
    x_pad = jnp.zeros((t_out, Bp, NUM_FEATURES), jnp.float32).at[:, :B, :].set(x_tm)
    x_flat = x_pad.reshape(t_out * Bp, NUM_FEATURES)

    w_ih0, b0, w_fused, b1_tiled, w_hr1 = _prepare_kernel_params(params, Bp)

    hid_flat = pl.pallas_call(
        partial(_lstm_kernel, T=t_out, Bp=Bp),
        out_shape=jax.ShapeDtypeStruct((t_out * Bp, 2 * HIDDEN_SIZE), jnp.float32),
        in_specs=[pl.BlockSpec(memory_space=pltpu.MemorySpace.VMEM)] * 5,
        out_specs=pl.BlockSpec(memory_space=pltpu.MemorySpace.VMEM),
        scratch_shapes=[
            pltpu.VMEM((t_out * Bp, 4 * HIDDEN_SIZE), jnp.float32),  # hoisted input gates
        ],
        compiler_params=pltpu.CompilerParams(vmem_limit_bytes=32 * 1024 * 1024),
    )(x_flat, w_ih0, b0, w_fused, b1_tiled)

    # Kernel output row block t holds the lane-dense [h0_{t+1} | h1_t] slab;
    # take the layer-1 half, then do the tiny P=2 projection + length mask here
    # (keeps all kernel stores full 128-lane unmasked vst).
    h1_seq = hid_flat.reshape(t_out, Bp, 2 * HIDDEN_SIZE)[:, :B, HIDDEN_SIZE:]  # (T, B, H)
    proj = jnp.einsum('tbh,hp->tbp', h1_seq, w_hr1)                             # (T, B, P)
    mask = jnp.asarray(np.arange(t_out)[:, None] < lengths_np[None, :])         # (T, B)
    out = jnp.where(mask[:, :, None], proj, 0.0)
    out = jnp.transpose(out, (1, 0, 2))                                         # (B, T, P)
    return out, jnp.asarray(lengths_np, dtype=jnp.int32)


def lstm_ref_numpy(x, lengths, params):
    """float64 numpy reference (same math as torch LSTM w/ projection + packing mask)."""
    w_ih, w_hh, b, w_hr = [np.asarray(p, np.float64) for p in params]
    lengths = np.asarray(lengths)
    t_out = int(lengths.max())
    x = np.asarray(x, np.float64)[:, :t_out, :]
    B = x.shape[0]
    H, P = HIDDEN_SIZE, PROJ_SIZE
    sig = lambda z: 1.0 / (1.0 + np.exp(-z))
    inp = x
    for l in range(NUM_LAYERS):
        h = np.zeros((B, P)); c = np.zeros((B, H))
        outs = []
        for t in range(t_out):
            gates = inp[:, t] @ w_ih[l] + h @ w_hh[l] + b[l]
            i = sig(gates[:, :H]); f = sig(gates[:, H:2 * H])
            g = np.tanh(gates[:, 2 * H:3 * H]); o = sig(gates[:, 3 * H:4 * H])
            c = f * c + i * g
            h = (o * np.tanh(c)) @ w_hr[l]
            outs.append(h)
        inp = np.stack(outs, axis=1)
    mask = (np.arange(t_out)[None, :] < lengths[:, None]).astype(np.float64)[:, :, None]
    return inp * mask


if __name__ == "__main__":
    key = jax.random.PRNGKey(0)
    kx, kp = jax.random.split(key)

    B, T = 4, 8
    x = jax.random.normal(kx, (B, T, NUM_FEATURES), dtype=jnp.float32)
    lengths = np.array([6, 8, 3, 5], dtype=np.int32)

    params = init_params(kp)

    out, out_lengths = lstm_forward(x, lengths, params)
    out = jax.block_until_ready(out)
    assert out.shape == (B, int(lengths.max()), PROJ_SIZE)

    ref = lstm_ref_numpy(np.asarray(x), lengths, params)
    np.testing.assert_allclose(np.asarray(out), ref, rtol=2e-3, atol=2e-3)

    print("KERNEL_OK")
</pallas_src>

<mosaic_0001>
module attributes {stable_mosaic.version = 11 : i64} {
  func.func @_lstm_kernel(%arg0: memref<64x2xf32, #tpu.memory_space<vmem>>, %arg1: memref<2x256xf32, #tpu.memory_space<vmem>>, %arg2: memref<1x256xf32, #tpu.memory_space<vmem>>, %arg3: memref<128x512xbf16, #tpu.memory_space<vmem>>, %arg4: memref<8x256xf32, #tpu.memory_space<vmem>>, %arg5: memref<64x128xf32, #tpu.memory_space<vmem>>, %arg6: memref<64x256xf32, #tpu.memory_space<vmem>>) attributes {dimension_semantics = [], scalar_prefetch = 0 : i64, scratch_operands = 1 : i64, tpu.core_type = #tpu.core_type<tc>} {
    %c0 = arith.constant 0 : index
    %c0_0 = arith.constant 0 : index
    %0 = vector.load %arg0[%c0, %c0_0] : memref<64x2xf32, #tpu.memory_space<vmem>>, vector<64x2xf32>
    %c0_1 = arith.constant 0 : index
    %c0_2 = arith.constant 0 : index
    %1 = vector.load %arg1[%c0_1, %c0_2] : memref<2x256xf32, #tpu.memory_space<vmem>>, vector<2x256xf32>
    %cst = arith.constant dense<0.000000e+00> : vector<64x256xf32>
    %2 = tpu.matmul %0, %1, %cst {dimension_numbers = #tpu.dot_dimension_numbers<[1], [0], [0], [1], [0, 0, 1, 1], [], []>} : vector<64x2xf32>, vector<2x256xf32>, vector<64x256xf32> -> vector<64x256xf32>
    %c0_3 = arith.constant 0 : index
    %c0_4 = arith.constant 0 : index
    %3 = vector.load %arg2[%c0_3, %c0_4] : memref<1x256xf32, #tpu.memory_space<vmem>>, vector<1x256xf32>
    %4 = vector.broadcast %3 : vector<1x256xf32> to vector<64x256xf32>
    %5 = arith.addf %2, %4 : vector<64x256xf32>
    %c0_5 = arith.constant 0 : index
    %c0_6 = arith.constant 0 : index
    %6 = vector.load %arg6[%c0_5, %c0_6] : memref<64x256xf32, #tpu.memory_space<vmem>>, vector<64x256xf32>
    tpu.vector_store %arg6[%c0_5, %c0_6], %5 {strides = array<i32>} : memref<64x256xf32, #tpu.memory_space<vmem>>, vector<64x256xf32>,
    %c0_7 = arith.constant 0 : index
    %c0_8 = arith.constant 0 : index
    %7 = vector.load %arg4[%c0_7, %c0_8] : memref<8x256xf32, #tpu.memory_space<vmem>>, vector<8x256xf32>
    %cst_9 = arith.constant 0.000000e+00 : f32
    %8 = vector.broadcast %cst_9 : f32 to vector<8x64xf32>
    %c0_10 = arith.constant 0 : index
    %c0_11 = arith.constant 0 : index
    %9 = vector.load %arg6[%c0_10, %c0_11] : memref<64x256xf32, #tpu.memory_space<vmem>>, vector<8x256xf32>
    %10 = math.tanh %9 : vector<8x256xf32>
    %11 = vector.extract_strided_slice %10 {offsets = [0, 0], sizes = [8, 192], strides = [1, 1]} : vector<8x256xf32> to vector<8x192xf32>
    %cst_12 = arith.constant 5.000000e-01 : f32
    %12 = vector.broadcast %cst_12 : f32 to vector<8x192xf32>
    %13 = arith.mulf %11, %12 : vector<8x192xf32>
    %cst_13 = arith.constant 5.000000e-01 : f32
    %14 = vector.broadcast %cst_13 : f32 to vector<8x192xf32>
    %15 = arith.addf %13, %14 : vector<8x192xf32>
    %16 = vector.extract_strided_slice %15 {offsets = [0, 64], sizes = [8, 64], strides = [1, 1]} : vector<8x192xf32> to vector<8x64xf32>
    %17 = arith.mulf %16, %8 : vector<8x64xf32>
    %18 = vector.extract_strided_slice %15 {offsets = [0, 0], sizes = [8, 64], strides = [1, 1]} : vector<8x192xf32> to vector<8x64xf32>
    %19 = vector.extract_strided_slice %10 {offsets = [0, 192], sizes = [8, 64], strides = [1, 1]} : vector<8x256xf32> to vector<8x64xf32>
    %20 = arith.mulf %18, %19 : vector<8x64xf32>
    %21 = arith.addf %17, %20 : vector<8x64xf32>
    %22 = vector.extract_strided_slice %15 {offsets = [0, 128], sizes = [8, 64], strides = [1, 1]} : vector<8x192xf32> to vector<8x64xf32>
    %23 = math.tanh %21 : vector<8x64xf32>
    %24 = arith.mulf %22, %23 : vector<8x64xf32>
    %25 = tpu.concatenate %24, %8 in 1 : vector<8x64xf32>, vector<8x64xf32> -> vector<8x128xf32>
    %c1_i32 = arith.constant 1 : i32
    %26 = arith.truncf %25 : vector<8x128xf32> to vector<8x128xbf16>
    %c0_14 = arith.constant 0 : index
    %c0_15 = arith.constant 0 : index
    %27 = vector.load %arg3[%c0_14, %c0_15] : memref<128x512xbf16, #tpu.memory_space<vmem>>, vector<128x512xbf16>
    %cst_16 = arith.constant dense<0.000000e+00> : vector<8x512xf32>
    %28 = tpu.matmul %26, %27, %cst_16 {dimension_numbers = #tpu.dot_dimension_numbers<[1], [0], [0], [1], [0, 0, 1, 1], [], []>} : vector<8x128xbf16>, vector<128x512xbf16>, vector<8x512xf32> -> vector<8x512xf32>
    %c8_i32 = arith.constant 8 : i32
    %29 = arith.muli %c1_i32, %c8_i32 : i32
    %30 = tpu.assume_multiple %29, 8 : i32
    %31 = vector.extract_strided_slice %28 {offsets = [0, 0], sizes = [8, 256], strides = [1, 1]} : vector<8x512xf32> to vector<8x256xf32>
    %32 = arith.index_cast %30 : i32 to index
    %c0_17 = arith.constant 0 : index
    %33 = vector.load %arg6[%32, %c0_17] : memref<64x256xf32, #tpu.memory_space<vmem>>, vector<8x256xf32>
    %34 = arith.addf %31, %33 : vector<8x256xf32>
    %35 = math.tanh %34 : vector<8x256xf32>
    %36 = vector.extract_strided_slice %35 {offsets = [0, 0], sizes = [8, 192], strides = [1, 1]} : vector<8x256xf32> to vector<8x192xf32>
    %cst_18 = arith.constant 5.000000e-01 : f32
    %37 = vector.broadcast %cst_18 : f32 to vector<8x192xf32>
    %38 = arith.mulf %36, %37 : vector<8x192xf32>
    %cst_19 = arith.constant 5.000000e-01 : f32
    %39 = vector.broadcast %cst_19 : f32 to vector<8x192xf32>
    %40 = arith.addf %38, %39 : vector<8x192xf32>
    %41 = vector.extract_strided_slice %40 {offsets = [0, 64], sizes = [8, 64], strides = [1, 1]} : vector<8x192xf32> to vector<8x64xf32>
    %42 = arith.mulf %41, %21 : vector<8x64xf32>
    %43 = vector.extract_strided_slice %40 {offsets = [0, 0], sizes = [8, 64], strides = [1, 1]} : vector<8x192xf32> to vector<8x64xf32>
    %44 = vector.extract_strided_slice %35 {offsets = [0, 192], sizes = [8, 64], strides = [1, 1]} : vector<8x256xf32> to vector<8x64xf32>
    %45 = arith.mulf %43, %44 : vector<8x64xf32>
    %46 = arith.addf %42, %45 : vector<8x64xf32>
    %47 = vector.extract_strided_slice %40 {offsets = [0, 128], sizes = [8, 64], strides = [1, 1]} : vector<8x192xf32> to vector<8x64xf32>
    %48 = math.tanh %46 : vector<8x64xf32>
    %49 = arith.mulf %47, %48 : vector<8x64xf32>
    %50 = vector.extract_strided_slice %28 {offsets = [0, 256], sizes = [8, 256], strides = [1, 1]} : vector<8x512xf32> to vector<8x256xf32>
    %51 = arith.addf %50, %7 : vector<8x256xf32>
    %52 = math.tanh %51 : vector<8x256xf32>
    %53 = vector.extract_strided_slice %52 {offsets = [0, 0], sizes = [8, 192], strides = [1, 1]} : vector<8x256xf32> to vector<8x192xf32>
    %cst_20 = arith.constant 5.000000e-01 : f32
    %54 = vector.broadcast %cst_20 : f32 to vector<8x192xf32>
    %55 = arith.mulf %53, %54 : vector<8x192xf32>
    %cst_21 = arith.constant 5.000000e-01 : f32
    %56 = vector.broadcast %cst_21 : f32 to vector<8x192xf32>
    %57 = arith.addf %55, %56 : vector<8x192xf32>
    %58 = vector.extract_strided_slice %57 {offsets = [0, 64], sizes = [8, 64], strides = [1, 1]} : vector<8x192xf32> to vector<8x64xf32>
    %59 = arith.mulf %58, %8 : vector<8x64xf32>
    %60 = vector.extract_strided_slice %57 {offsets = [0, 0], sizes = [8, 64], strides = [1, 1]} : vector<8x192xf32> to vector<8x64xf32>
    %61 = vector.extract_strided_slice %52 {offsets = [0, 192], sizes = [8, 64], strides = [1, 1]} : vector<8x256xf32> to vector<8x64xf32>
    %62 = arith.mulf %60, %61 : vector<8x64xf32>
    %63 = arith.addf %59, %62 : vector<8x64xf32>
    %64 = vector.extract_strided_slice %57 {offsets = [0, 128], sizes = [8, 64], strides = [1, 1]} : vector<8x192xf32> to vector<8x64xf32>
    %65 = math.tanh %63 : vector<8x64xf32>
    %66 = arith.mulf %64, %65 : vector<8x64xf32>
    %67 = tpu.concatenate %49, %66 in 1 : vector<8x64xf32>, vector<8x64xf32> -> vector<8x128xf32>
    %c1_i32_22 = arith.constant 1 : i32
    %68 = arith.subi %c1_i32, %c1_i32_22 : i32
    %c8_i32_23 = arith.constant 8 : i32
    %69 = arith.muli %68, %c8_i32_23 : i32
    %70 = tpu.assume_multiple %69, 8 : i32
    %71 = arith.index_cast %70 : i32 to index
    %c0_24 = arith.constant 0 : index
    %72 = vector.load %arg5[%71, %c0_24] : memref<64x128xf32, #tpu.memory_space<vmem>>, vector<8x128xf32>
    tpu.vector_store %arg5[%71, %c0_24], %67 {strides = array<i32>} : memref<64x128xf32, #tpu.memory_space<vmem>>, vector<8x128xf32>,
    %c2_i32 = arith.constant 2 : i32
    %73 = arith.truncf %67 : vector<8x128xf32> to vector<8x128xbf16>
    %c0_25 = arith.constant 0 : index
    %c0_26 = arith.constant 0 : index
    %74 = vector.load %arg3[%c0_25, %c0_26] : memref<128x512xbf16, #tpu.memory_space<vmem>>, vector<128x512xbf16>
    %cst_27 = arith.constant dense<0.000000e+00> : vector<8x512xf32>
    %75 = tpu.matmul %73, %74, %cst_27 {dimension_numbers = #tpu.dot_dimension_numbers<[1], [0], [0], [1], [0, 0, 1, 1], [], []>} : vector<8x128xbf16>, vector<128x512xbf16>, vector<8x512xf32> -> vector<8x512xf32>
    %c8_i32_28 = arith.constant 8 : i32
    %76 = arith.muli %c2_i32, %c8_i32_28 : i32
    %77 = tpu.assume_multiple %76, 8 : i32
    %78 = vector.extract_strided_slice %75 {offsets = [0, 0], sizes = [8, 256], strides = [1, 1]} : vector<8x512xf32> to vector<8x256xf32>
    %79 = arith.index_cast %77 : i32 to index
    %c0_29 = arith.constant 0 : index
    %80 = vector.load %arg6[%79, %c0_29] : memref<64x256xf32, #tpu.memory_space<vmem>>, vector<8x256xf32>
    %81 = arith.addf %78, %80 : vector<8x256xf32>
    %82 = math.tanh %81 : vector<8x256xf32>
    %83 = vector.extract_strided_slice %82 {offsets = [0, 0], sizes = [8, 192], strides = [1, 1]} : vector<8x256xf32> to vector<8x192xf32>
    %cst_30 = arith.constant 5.000000e-01 : f32
    %84 = vector.broadcast %cst_30 : f32 to vector<8x192xf32>
    %85 = arith.mulf %83, %84 : vector<8x192xf32>
    %cst_31 = arith.constant 5.000000e-01 : f32
    %86 = vector.broadcast %cst_31 : f32 to vector<8x192xf32>
    %87 = arith.addf %85, %86 : vector<8x192xf32>
    %88 = vector.extract_strided_slice %87 {offsets = [0, 64], sizes = [8, 64], strides = [1, 1]} : vector<8x192xf32> to vector<8x64xf32>
    %89 = arith.mulf %88, %46 : vector<8x64xf32>
    %90 = vector.extract_strided_slice %87 {offsets = [0, 0], sizes = [8, 64], strides = [1, 1]} : vector<8x192xf32> to vector<8x64xf32>
    %91 = vector.extract_strided_slice %82 {offsets = [0, 192], sizes = [8, 64], strides = [1, 1]} : vector<8x256xf32> to vector<8x64xf32>
    %92 = arith.mulf %90, %91 : vector<8x64xf32>
    %93 = arith.addf %89, %92 : vector<8x64xf32>
    %94 = vector.extract_strided_slice %87 {offsets = [0, 128], sizes = [8, 64], strides = [1, 1]} : vector<8x192xf32> to vector<8x64xf32>
    %95 = math.tanh %93 : vector<8x64xf32>
    %96 = arith.mulf %94, %95 : vector<8x64xf32>
    %97 = vector.extract_strided_slice %75 {offsets = [0, 256], sizes = [8, 256], strides = [1, 1]} : vector<8x512xf32> to vector<8x256xf32>
    %98 = arith.addf %97, %7 : vector<8x256xf32>
    %99 = math.tanh %98 : vector<8x256xf32>
    %100 = vector.extract_strided_slice %99 {offsets = [0, 0], sizes = [8, 192], strides = [1, 1]} : vector<8x256xf32> to vector<8x192xf32>
    %cst_32 = arith.constant 5.000000e-01 : f32
    %101 = vector.broadcast %cst_32 : f32 to vector<8x192xf32>
    %102 = arith.mulf %100, %101 : vector<8x192xf32>
    %cst_33 = arith.constant 5.000000e-01 : f32
    %103 = vector.broadcast %cst_33 : f32 to vector<8x192xf32>
    %104 = arith.addf %102, %103 : vector<8x192xf32>
    %105 = vector.extract_strided_slice %104 {offsets = [0, 64], sizes = [8, 64], strides = [1, 1]} : vector<8x192xf32> to vector<8x64xf32>
    %106 = arith.mulf %105, %63 : vector<8x64xf32>
    %107 = vector.extract_strided_slice %104 {offsets = [0, 0], sizes = [8, 64], strides = [1, 1]} : vector<8x192xf32> to vector<8x64xf32>
    %108 = vector.extract_strided_slice %99 {offsets = [0, 192], sizes = [8, 64], strides = [1, 1]} : vector<8x256xf32> to vector<8x64xf32>
    %109 = arith.mulf %107, %108 : vector<8x64xf32>
    %110 = arith.addf %106, %109 : vector<8x64xf32>
    %111 = vector.extract_strided_slice %104 {offsets = [0, 128], sizes = [8, 64], strides = [1, 1]} : vector<8x192xf32> to vector<8x64xf32>
    %112 = math.tanh %110 : vector<8x64xf32>
    %113 = arith.mulf %111, %112 : vector<8x64xf32>
    %114 = tpu.concatenate %96, %113 in 1 : vector<8x64xf32>, vector<8x64xf32> -> vector<8x128xf32>
    %c1_i32_34 = arith.constant 1 : i32
    %115 = arith.subi %c2_i32, %c1_i32_34 : i32
    %c8_i32_35 = arith.constant 8 : i32
    %116 = arith.muli %115, %c8_i32_35 : i32
    %117 = tpu.assume_multiple %116, 8 : i32
    %118 = arith.index_cast %117 : i32 to index
    %c0_36 = arith.constant 0 : index
    %119 = vector.load %arg5[%118, %c0_36] : memref<64x128xf32, #tpu.memory_space<vmem>>, vector<8x128xf32>
    tpu.vector_store %arg5[%118, %c0_36], %114 {strides = array<i32>} : memref<64x128xf32, #tpu.memory_space<vmem>>, vector<8x128xf32>,
    %c3_i32 = arith.constant 3 : i32
    %120 = arith.truncf %114 : vector<8x128xf32> to vector<8x128xbf16>
    %c0_37 = arith.constant 0 : index
    %c0_38 = arith.constant 0 : index
    %121 = vector.load %arg3[%c0_37, %c0_38] : memref<128x512xbf16, #tpu.memory_space<vmem>>, vector<128x512xbf16>
    %cst_39 = arith.constant dense<0.000000e+00> : vector<8x512xf32>
    %122 = tpu.matmul %120, %121, %cst_39 {dimension_numbers = #tpu.dot_dimension_numbers<[1], [0], [0], [1], [0, 0, 1, 1], [], []>} : vector<8x128xbf16>, vector<128x512xbf16>, vector<8x512xf32> -> vector<8x512xf32>
    %c8_i32_40 = arith.constant 8 : i32
    %123 = arith.muli %c3_i32, %c8_i32_40 : i32
    %124 = tpu.assume_multiple %123, 8 : i32
    %125 = vector.extract_strided_slice %122 {offsets = [0, 0], sizes = [8, 256], strides = [1, 1]} : vector<8x512xf32> to vector<8x256xf32>
    %126 = arith.index_cast %124 : i32 to index
    %c0_41 = arith.constant 0 : index
    %127 = vector.load %arg6[%126, %c0_41] : memref<64x256xf32, #tpu.memory_space<vmem>>, vector<8x256xf32>
    %128 = arith.addf %125, %127 : vector<8x256xf32>
    %129 = math.tanh %128 : vector<8x256xf32>
    %130 = vector.extract_strided_slice %129 {offsets = [0, 0], sizes = [8, 192], strides = [1, 1]} : vector<8x256xf32> to vector<8x192xf32>
    %cst_42 = arith.constant 5.000000e-01 : f32
    %131 = vector.broadcast %cst_42 : f32 to vector<8x192xf32>
    %132 = arith.mulf %130, %131 : vector<8x192xf32>
    %cst_43 = arith.constant 5.000000e-01 : f32
    %133 = vector.broadcast %cst_43 : f32 to vector<8x192xf32>
    %134 = arith.addf %132, %133 : vector<8x192xf32>
    %135 = vector.extract_strided_slice %134 {offsets = [0, 64], sizes = [8, 64], strides = [1, 1]} : vector<8x192xf32> to vector<8x64xf32>
    %136 = arith.mulf %135, %93 : vector<8x64xf32>
    %137 = vector.extract_strided_slice %134 {offsets = [0, 0], sizes = [8, 64], strides = [1, 1]} : vector<8x192xf32> to vector<8x64xf32>
    %138 = vector.extract_strided_slice %129 {offsets = [0, 192], sizes = [8, 64], strides = [1, 1]} : vector<8x256xf32> to vector<8x64xf32>
    %139 = arith.mulf %137, %138 : vector<8x64xf32>
    %140 = arith.addf %136, %139 : vector<8x64xf32>
    %141 = vector.extract_strided_slice %134 {offsets = [0, 128], sizes = [8, 64], strides = [1, 1]} : vector<8x192xf32> to vector<8x64xf32>
    %142 = math.tanh %140 : vector<8x64xf32>
    %143 = arith.mulf %141, %142 : vector<8x64xf32>
    %144 = vector.extract_strided_slice %122 {offsets = [0, 256], sizes = [8, 256], strides = [1, 1]} : vector<8x512xf32> to vector<8x256xf32>
    %145 = arith.addf %144, %7 : vector<8x256xf32>
    %146 = math.tanh %145 : vector<8x256xf32>
    %147 = vector.extract_strided_slice %146 {offsets = [0, 0], sizes = [8, 192], strides = [1, 1]} : vector<8x256xf32> to vector<8x192xf32>
    %cst_44 = arith.constant 5.000000e-01 : f32
    %148 = vector.broadcast %cst_44 : f32 to vector<8x192xf32>
    %149 = arith.mulf %147, %148 : vector<8x192xf32>
    %cst_45 = arith.constant 5.000000e-01 : f32
    %150 = vector.broadcast %cst_45 : f32 to vector<8x192xf32>
    %151 = arith.addf %149, %150 : vector<8x192xf32>
    %152 = vector.extract_strided_slice %151 {offsets = [0, 64], sizes = [8, 64], strides = [1, 1]} : vector<8x192xf32> to vector<8x64xf32>
    %153 = arith.mulf %152, %110 : vector<8x64xf32>
    %154 = vector.extract_strided_slice %151 {offsets = [0, 0], sizes = [8, 64], strides = [1, 1]} : vector<8x192xf32> to vector<8x64xf32>
    %155 = vector.extract_strided_slice %146 {offsets = [0, 192], sizes = [8, 64], strides = [1, 1]} : vector<8x256xf32> to vector<8x64xf32>
    %156 = arith.mulf %154, %155 : vector<8x64xf32>
    %157 = arith.addf %153, %156 : vector<8x64xf32>
    %158 = vector.extract_strided_slice %151 {offsets = [0, 128], sizes = [8, 64], strides = [1, 1]} : vector<8x192xf32> to vector<8x64xf32>
    %159 = math.tanh %157 : vector<8x64xf32>
    %160 = arith.mulf %158, %159 : vector<8x64xf32>
    %161 = tpu.concatenate %143, %160 in 1 : vector<8x64xf32>, vector<8x64xf32> -> vector<8x128xf32>
    %c1_i32_46 = arith.constant 1 : i32
    %162 = arith.subi %c3_i32, %c1_i32_46 : i32
    %c8_i32_47 = arith.constant 8 : i32
    %163 = arith.muli %162, %c8_i32_47 : i32
    %164 = tpu.assume_multiple %163, 8 : i32
    %165 = arith.index_cast %164 : i32 to index
    %c0_48 = arith.constant 0 : index
    %166 = vector.load %arg5[%165, %c0_48] : memref<64x128xf32, #tpu.memory_space<vmem>>, vector<8x128xf32>
    tpu.vector_store %arg5[%165, %c0_48], %161 {strides = array<i32>} : memref<64x128xf32, #tpu.memory_space<vmem>>, vector<8x128xf32>,
    %c4_i32 = arith.constant 4 : i32
    %167 = arith.truncf %161 : vector<8x128xf32> to vector<8x128xbf16>
    %c0_49 = arith.constant 0 : index
    %c0_50 = arith.constant 0 : index
    %168 = vector.load %arg3[%c0_49, %c0_50] : memref<128x512xbf16, #tpu.memory_space<vmem>>, vector<128x512xbf16>
    %cst_51 = arith.constant dense<0.000000e+00> : vector<8x512xf32>
    %169 = tpu.matmul %167, %168, %cst_51 {dimension_numbers = #tpu.dot_dimension_numbers<[1], [0], [0], [1], [0, 0, 1, 1], [], []>} : vector<8x128xbf16>, vector<128x512xbf16>, vector<8x512xf32> -> vector<8x512xf32>
    %c8_i32_52 = arith.constant 8 : i32
    %170 = arith.muli %c4_i32, %c8_i32_52 : i32
    %171 = tpu.assume_multiple %170, 8 : i32
    %172 = vector.extract_strided_slice %169 {offsets = [0, 0], sizes = [8, 256], strides = [1, 1]} : vector<8x512xf32> to vector<8x256xf32>
    %173 = arith.index_cast %171 : i32 to index
    %c0_53 = arith.constant 0 : index
    %174 = vector.load %arg6[%173, %c0_53] : memref<64x256xf32, #tpu.memory_space<vmem>>, vector<8x256xf32>
    %175 = arith.addf %172, %174 : vector<8x256xf32>
    %176 = math.tanh %175 : vector<8x256xf32>
    %177 = vector.extract_strided_slice %176 {offsets = [0, 0], sizes = [8, 192], strides = [1, 1]} : vector<8x256xf32> to vector<8x192xf32>
    %cst_54 = arith.constant 5.000000e-01 : f32
    %178 = vector.broadcast %cst_54 : f32 to vector<8x192xf32>
    %179 = arith.mulf %177, %178 : vector<8x192xf32>
    %cst_55 = arith.constant 5.000000e-01 : f32
    %180 = vector.broadcast %cst_55 : f32 to vector<8x192xf32>
    %181 = arith.addf %179, %180 : vector<8x192xf32>
    %182 = vector.extract_strided_slice %181 {offsets = [0, 64], sizes = [8, 64], strides = [1, 1]} : vector<8x192xf32> to vector<8x64xf32>
    %183 = arith.mulf %182, %140 : vector<8x64xf32>
    %184 = vector.extract_strided_slice %181 {offsets = [0, 0], sizes = [8, 64], strides = [1, 1]} : vector<8x192xf32> to vector<8x64xf32>
    %185 = vector.extract_strided_slice %176 {offsets = [0, 192], sizes = [8, 64], strides = [1, 1]} : vector<8x256xf32> to vector<8x64xf32>
    %186 = arith.mulf %184, %185 : vector<8x64xf32>
    %187 = arith.addf %183, %186 : vector<8x64xf32>
    %188 = vector.extract_strided_slice %181 {offsets = [0, 128], sizes = [8, 64], strides = [1, 1]} : vector<8x192xf32> to vector<8x64xf32>
    %189 = math.tanh %187 : vector<8x64xf32>
    %190 = arith.mulf %188, %189 : vector<8x64xf32>
    %191 = vector.extract_strided_slice %169 {offsets = [0, 256], sizes = [8, 256], strides = [1, 1]} : vector<8x512xf32> to vector<8x256xf32>
    %192 = arith.addf %191, %7 : vector<8x256xf32>
    %193 = math.tanh %192 : vector<8x256xf32>
    %194 = vector.extract_strided_slice %193 {offsets = [0, 0], sizes = [8, 192], strides = [1, 1]} : vector<8x256xf32> to vector<8x192xf32>
    %cst_56 = arith.constant 5.000000e-01 : f32
    %195 = vector.broadcast %cst_56 : f32 to vector<8x192xf32>
    %196 = arith.mulf %194, %195 : vector<8x192xf32>
    %cst_57 = arith.constant 5.000000e-01 : f32
    %197 = vector.broadcast %cst_57 : f32 to vector<8x192xf32>
    %198 = arith.addf %196, %197 : vector<8x192xf32>
    %199 = vector.extract_strided_slice %198 {offsets = [0, 64], sizes = [8, 64], strides = [1, 1]} : vector<8x192xf32> to vector<8x64xf32>
    %200 = arith.mulf %199, %157 : vector<8x64xf32>
    %201 = vector.extract_strided_slice %198 {offsets = [0, 0], sizes = [8, 64], strides = [1, 1]} : vector<8x192xf32> to vector<8x64xf32>
    %202 = vector.extract_strided_slice %193 {offsets = [0, 192], sizes = [8, 64], strides = [1, 1]} : vector<8x256xf32> to vector<8x64xf32>
    %203 = arith.mulf %201, %202 : vector<8x64xf32>
    %204 = arith.addf %200, %203 : vector<8x64xf32>
    %205 = vector.extract_strided_slice %198 {offsets = [0, 128], sizes = [8, 64], strides = [1, 1]} : vector<8x192xf32> to vector<8x64xf32>
    %206 = math.tanh %204 : vector<8x64xf32>
    %207 = arith.mulf %205, %206 : vector<8x64xf32>
    %208 = tpu.concatenate %190, %207 in 1 : vector<8x64xf32>, vector<8x64xf32> -> vector<8x128xf32>
    %c1_i32_58 = arith.constant 1 : i32
    %209 = arith.subi %c4_i32, %c1_i32_58 : i32
    %c8_i32_59 = arith.constant 8 : i32
    %210 = arith.muli %209, %c8_i32_59 : i32
    %211 = tpu.assume_multiple %210, 8 : i32
    %212 = arith.index_cast %211 : i32 to index
    %c0_60 = arith.constant 0 : index
    %213 = vector.load %arg5[%212, %c0_60] : memref<64x128xf32, #tpu.memory_space<vmem>>, vector<8x128xf32>
    tpu.vector_store %arg5[%212, %c0_60], %208 {strides = array<i32>} : memref<64x128xf32, #tpu.memory_space<vmem>>, vector<8x128xf32>,
    %c5_i32 = arith.constant 5 : i32
    %214 = arith.truncf %208 : vector<8x128xf32> to vector<8x128xbf16>
    %c0_61 = arith.constant 0 : index
    %c0_62 = arith.constant 0 : index
    %215 = vector.load %arg3[%c0_61, %c0_62] : memref<128x512xbf16, #tpu.memory_space<vmem>>, vector<128x512xbf16>
    %cst_63 = arith.constant dense<0.000000e+00> : vector<8x512xf32>
    %216 = tpu.matmul %214, %215, %cst_63 {dimension_numbers = #tpu.dot_dimension_numbers<[1], [0], [0], [1], [0, 0, 1, 1], [], []>} : vector<8x128xbf16>, vector<128x512xbf16>, vector<8x512xf32> -> vector<8x512xf32>
    %c8_i32_64 = arith.constant 8 : i32
    %217 = arith.muli %c5_i32, %c8_i32_64 : i32
    %218 = tpu.assume_multiple %217, 8 : i32
    %219 = vector.extract_strided_slice %216 {offsets = [0, 0], sizes = [8, 256], strides = [1, 1]} : vector<8x512xf32> to vector<8x256xf32>
    %220 = arith.index_cast %218 : i32 to index
    %c0_65 = arith.constant 0 : index
    %221 = vector.load %arg6[%220, %c0_65] : memref<64x256xf32, #tpu.memory_space<vmem>>, vector<8x256xf32>
    %222 = arith.addf %219, %221 : vector<8x256xf32>
    %223 = math.tanh %222 : vector<8x256xf32>
    %224 = vector.extract_strided_slice %223 {offsets = [0, 0], sizes = [8, 192], strides = [1, 1]} : vector<8x256xf32> to vector<8x192xf32>
    %cst_66 = arith.constant 5.000000e-01 : f32
    %225 = vector.broadcast %cst_66 : f32 to vector<8x192xf32>
    %226 = arith.mulf %224, %225 : vector<8x192xf32>
    %cst_67 = arith.constant 5.000000e-01 : f32
    %227 = vector.broadcast %cst_67 : f32 to vector<8x192xf32>
    %228 = arith.addf %226, %227 : vector<8x192xf32>
    %229 = vector.extract_strided_slice %228 {offsets = [0, 64], sizes = [8, 64], strides = [1, 1]} : vector<8x192xf32> to vector<8x64xf32>
    %230 = arith.mulf %229, %187 : vector<8x64xf32>
    %231 = vector.extract_strided_slice %228 {offsets = [0, 0], sizes = [8, 64], strides = [1, 1]} : vector<8x192xf32> to vector<8x64xf32>
    %232 = vector.extract_strided_slice %223 {offsets = [0, 192], sizes = [8, 64], strides = [1, 1]} : vector<8x256xf32> to vector<8x64xf32>
    %233 = arith.mulf %231, %232 : vector<8x64xf32>
    %234 = arith.addf %230, %233 : vector<8x64xf32>
    %235 = vector.extract_strided_slice %228 {offsets = [0, 128], sizes = [8, 64], strides = [1, 1]} : vector<8x192xf32> to vector<8x64xf32>
    %236 = math.tanh %234 : vector<8x64xf32>
    %237 = arith.mulf %235, %236 : vector<8x64xf32>
    %238 = vector.extract_strided_slice %216 {offsets = [0, 256], sizes = [8, 256], strides = [1, 1]} : vector<8x512xf32> to vector<8x256xf32>
    %239 = arith.addf %238, %7 : vector<8x256xf32>
    %240 = math.tanh %239 : vector<8x256xf32>
    %241 = vector.extract_strided_slice %240 {offsets = [0, 0], sizes = [8, 192], strides = [1, 1]} : vector<8x256xf32> to vector<8x192xf32>
    %cst_68 = arith.constant 5.000000e-01 : f32
    %242 = vector.broadcast %cst_68 : f32 to vector<8x192xf32>
    %243 = arith.mulf %241, %242 : vector<8x192xf32>
    %cst_69 = arith.constant 5.000000e-01 : f32
    %244 = vector.broadcast %cst_69 : f32 to vector<8x192xf32>
    %245 = arith.addf %243, %244 : vector<8x192xf32>
    %246 = vector.extract_strided_slice %245 {offsets = [0, 64], sizes = [8, 64], strides = [1, 1]} : vector<8x192xf32> to vector<8x64xf32>
    %247 = arith.mulf %246, %204 : vector<8x64xf32>
    %248 = vector.extract_strided_slice %245 {offsets = [0, 0], sizes = [8, 64], strides = [1, 1]} : vector<8x192xf32> to vector<8x64xf32>
    %249 = vector.extract_strided_slice %240 {offsets = [0, 192], sizes = [8, 64], strides = [1, 1]} : vector<8x256xf32> to vector<8x64xf32>
    %250 = arith.mulf %248, %249 : vector<8x64xf32>
    %251 = arith.addf %247, %250 : vector<8x64xf32>
    %252 = vector.extract_strided_slice %245 {offsets = [0, 128], sizes = [8, 64], strides = [1, 1]} : vector<8x192xf32> to vector<8x64xf32>
    %253 = math.tanh %251 : vector<8x64xf32>
    %254 = arith.mulf %252, %253 : vector<8x64xf32>
    %255 = tpu.concatenate %237, %254 in 1 : vector<8x64xf32>, vector<8x64xf32> -> vector<8x128xf32>
    %c1_i32_70 = arith.constant 1 : i32
    %256 = arith.subi %c5_i32, %c1_i32_70 : i32
    %c8_i32_71 = arith.constant 8 : i32
    %257 = arith.muli %256, %c8_i32_71 : i32
    %258 = tpu.assume_multiple %257, 8 : i32
    %259 = arith.index_cast %258 : i32 to index
    %c0_72 = arith.constant 0 : index
    %260 = vector.load %arg5[%259, %c0_72] : memref<64x128xf32, #tpu.memory_space<vmem>>, vector<8x128xf32>
    tpu.vector_store %arg5[%259, %c0_72], %255 {strides = array<i32>} : memref<64x128xf32, #tpu.memory_space<vmem>>, vector<8x128xf32>,
    %c6_i32 = arith.constant 6 : i32
    %261 = arith.truncf %255 : vector<8x128xf32> to vector<8x128xbf16>
    %c0_73 = arith.constant 0 : index
    %c0_74 = arith.constant 0 : index
    %262 = vector.load %arg3[%c0_73, %c0_74] : memref<128x512xbf16, #tpu.memory_space<vmem>>, vector<128x512xbf16>
    %cst_75 = arith.constant dense<0.000000e+00> : vector<8x512xf32>
    %263 = tpu.matmul %261, %262, %cst_75 {dimension_numbers = #tpu.dot_dimension_numbers<[1], [0], [0], [1], [0, 0, 1, 1], [], []>} : vector<8x128xbf16>, vector<128x512xbf16>, vector<8x512xf32> -> vector<8x512xf32>
    %c8_i32_76 = arith.constant 8 : i32
    %264 = arith.muli %c6_i32, %c8_i32_76 : i32
    %265 = tpu.assume_multiple %264, 8 : i32
    %266 = vector.extract_strided_slice %263 {offsets = [0, 0], sizes = [8, 256], strides = [1, 1]} : vector<8x512xf32> to vector<8x256xf32>
    %267 = arith.index_cast %265 : i32 to index
    %c0_77 = arith.constant 0 : index
    %268 = vector.load %arg6[%267, %c0_77] : memref<64x256xf32, #tpu.memory_space<vmem>>, vector<8x256xf32>
    %269 = arith.addf %266, %268 : vector<8x256xf32>
    %270 = math.tanh %269 : vector<8x256xf32>
    %271 = vector.extract_strided_slice %270 {offsets = [0, 0], sizes = [8, 192], strides = [1, 1]} : vector<8x256xf32> to vector<8x192xf32>
    %cst_78 = arith.constant 5.000000e-01 : f32
    %272 = vector.broadcast %cst_78 : f32 to vector<8x192xf32>
    %273 = arith.mulf %271, %272 : vector<8x192xf32>
    %cst_79 = arith.constant 5.000000e-01 : f32
    %274 = vector.broadcast %cst_79 : f32 to vector<8x192xf32>
    %275 = arith.addf %273, %274 : vector<8x192xf32>
    %276 = vector.extract_strided_slice %275 {offsets = [0, 64], sizes = [8, 64], strides = [1, 1]} : vector<8x192xf32> to vector<8x64xf32>
    %277 = arith.mulf %276, %234 : vector<8x64xf32>
    %278 = vector.extract_strided_slice %275 {offsets = [0, 0], sizes = [8, 64], strides = [1, 1]} : vector<8x192xf32> to vector<8x64xf32>
    %279 = vector.extract_strided_slice %270 {offsets = [0, 192], sizes = [8, 64], strides = [1, 1]} : vector<8x256xf32> to vector<8x64xf32>
    %280 = arith.mulf %278, %279 : vector<8x64xf32>
    %281 = arith.addf %277, %280 : vector<8x64xf32>
    %282 = vector.extract_strided_slice %275 {offsets = [0, 128], sizes = [8, 64], strides = [1, 1]} : vector<8x192xf32> to vector<8x64xf32>
    %283 = math.tanh %281 : vector<8x64xf32>
    %284 = arith.mulf %282, %283 : vector<8x64xf32>
    %285 = vector.extract_strided_slice %263 {offsets = [0, 256], sizes = [8, 256], strides = [1, 1]} : vector<8x512xf32> to vector<8x256xf32>
    %286 = arith.addf %285, %7 : vector<8x256xf32>
    %287 = math.tanh %286 : vector<8x256xf32>
    %288 = vector.extract_strided_slice %287 {offsets = [0, 0], sizes = [8, 192], strides = [1, 1]} : vector<8x256xf32> to vector<8x192xf32>
    %cst_80 = arith.constant 5.000000e-01 : f32
    %289 = vector.broadcast %cst_80 : f32 to vector<8x192xf32>
    %290 = arith.mulf %288, %289 : vector<8x192xf32>
    %cst_81 = arith.constant 5.000000e-01 : f32
    %291 = vector.broadcast %cst_81 : f32 to vector<8x192xf32>
    %292 = arith.addf %290, %291 : vector<8x192xf32>
    %293 = vector.extract_strided_slice %292 {offsets = [0, 64], sizes = [8, 64], strides = [1, 1]} : vector<8x192xf32> to vector<8x64xf32>
    %294 = arith.mulf %293, %251 : vector<8x64xf32>
    %295 = vector.extract_strided_slice %292 {offsets = [0, 0], sizes = [8, 64], strides = [1, 1]} : vector<8x192xf32> to vector<8x64xf32>
    %296 = vector.extract_strided_slice %287 {offsets = [0, 192], sizes = [8, 64], strides = [1, 1]} : vector<8x256xf32> to vector<8x64xf32>
    %297 = arith.mulf %295, %296 : vector<8x64xf32>
    %298 = arith.addf %294, %297 : vector<8x64xf32>
    %299 = vector.extract_strided_slice %292 {offsets = [0, 128], sizes = [8, 64], strides = [1, 1]} : vector<8x192xf32> to vector<8x64xf32>
    %300 = math.tanh %298 : vector<8x64xf32>
    %301 = arith.mulf %299, %300 : vector<8x64xf32>
    %302 = tpu.concatenate %284, %301 in 1 : vector<8x64xf32>, vector<8x64xf32> -> vector<8x128xf32>
    %c1_i32_82 = arith.constant 1 : i32
    %303 = arith.subi %c6_i32, %c1_i32_82 : i32
    %c8_i32_83 = arith.constant 8 : i32
    %304 = arith.muli %303, %c8_i32_83 : i32
    %305 = tpu.assume_multiple %304, 8 : i32
    %306 = arith.index_cast %305 : i32 to index
    %c0_84 = arith.constant 0 : index
    %307 = vector.load %arg5[%306, %c0_84] : memref<64x128xf32, #tpu.memory_space<vmem>>, vector<8x128xf32>
    tpu.vector_store %arg5[%306, %c0_84], %302 {strides = array<i32>} : memref<64x128xf32, #tpu.memory_space<vmem>>, vector<8x128xf32>,
    %c7_i32 = arith.constant 7 : i32
    %308 = arith.truncf %302 : vector<8x128xf32> to vector<8x128xbf16>
    %c0_85 = arith.constant 0 : index
    %c0_86 = arith.constant 0 : index
    %309 = vector.load %arg3[%c0_85, %c0_86] : memref<128x512xbf16, #tpu.memory_space<vmem>>, vector<128x512xbf16>
    %cst_87 = arith.constant dense<0.000000e+00> : vector<8x512xf32>
    %310 = tpu.matmul %308, %309, %cst_87 {dimension_numbers = #tpu.dot_dimension_numbers<[1], [0], [0], [1], [0, 0, 1, 1], [], []>} : vector<8x128xbf16>, vector<128x512xbf16>, vector<8x512xf32> -> vector<8x512xf32>
    %c8_i32_88 = arith.constant 8 : i32
    %311 = arith.muli %c7_i32, %c8_i32_88 : i32
    %312 = tpu.assume_multiple %311, 8 : i32
    %313 = vector.extract_strided_slice %310 {offsets = [0, 0], sizes = [8, 256], strides = [1, 1]} : vector<8x512xf32> to vector<8x256xf32>
    %314 = arith.index_cast %312 : i32 to index
    %c0_89 = arith.constant 0 : index
    %315 = vector.load %arg6[%314, %c0_89] : memref<64x256xf32, #tpu.memory_space<vmem>>, vector<8x256xf32>
    %316 = arith.addf %313, %315 : vector<8x256xf32>
    %317 = math.tanh %316 : vector<8x256xf32>
    %318 = vector.extract_strided_slice %317 {offsets = [0, 0], sizes = [8, 192], strides = [1, 1]} : vector<8x256xf32> to vector<8x192xf32>
    %cst_90 = arith.constant 5.000000e-01 : f32
    %319 = vector.broadcast %cst_90 : f32 to vector<8x192xf32>
    %320 = arith.mulf %318, %319 : vector<8x192xf32>
    %cst_91 = arith.constant 5.000000e-01 : f32
    %321 = vector.broadcast %cst_91 : f32 to vector<8x192xf32>
    %322 = arith.addf %320, %321 : vector<8x192xf32>
    %323 = vector.extract_strided_slice %322 {offsets = [0, 64], sizes = [8, 64], strides = [1, 1]} : vector<8x192xf32> to vector<8x64xf32>
    %324 = arith.mulf %323, %281 : vector<8x64xf32>
    %325 = vector.extract_strided_slice %322 {offsets = [0, 0], sizes = [8, 64], strides = [1, 1]} : vector<8x192xf32> to vector<8x64xf32>
    %326 = vector.extract_strided_slice %317 {offsets = [0, 192], sizes = [8, 64], strides = [1, 1]} : vector<8x256xf32> to vector<8x64xf32>
    %327 = arith.mulf %325, %326 : vector<8x64xf32>
    %328 = arith.addf %324, %327 : vector<8x64xf32>
    %329 = vector.extract_strided_slice %322 {offsets = [0, 128], sizes = [8, 64], strides = [1, 1]} : vector<8x192xf32> to vector<8x64xf32>
    %330 = math.tanh %328 : vector<8x64xf32>
    %331 = arith.mulf %329, %330 : vector<8x64xf32>
    %332 = vector.extract_strided_slice %310 {offsets = [0, 256], sizes = [8, 256], strides = [1, 1]} : vector<8x512xf32> to vector<8x256xf32>
    %333 = arith.addf %332, %7 : vector<8x256xf32>
    %334 = math.tanh %333 : vector<8x256xf32>
    %335 = vector.extract_strided_slice %334 {offsets = [0, 0], sizes = [8, 192], strides = [1, 1]} : vector<8x256xf32> to vector<8x192xf32>
    %cst_92 = arith.constant 5.000000e-01 : f32
    %336 = vector.broadcast %cst_92 : f32 to vector<8x192xf32>
    %337 = arith.mulf %335, %336 : vector<8x192xf32>
    %cst_93 = arith.constant 5.000000e-01 : f32
    %338 = vector.broadcast %cst_93 : f32 to vector<8x192xf32>
    %339 = arith.addf %337, %338 : vector<8x192xf32>
    %340 = vector.extract_strided_slice %339 {offsets = [0, 64], sizes = [8, 64], strides = [1, 1]} : vector<8x192xf32> to vector<8x64xf32>
    %341 = arith.mulf %340, %298 : vector<8x64xf32>
    %342 = vector.extract_strided_slice %339 {offsets = [0, 0], sizes = [8, 64], strides = [1, 1]} : vector<8x192xf32> to vector<8x64xf32>
    %343 = vector.extract_strided_slice %334 {offsets = [0, 192], sizes = [8, 64], strides = [1, 1]} : vector<8x256xf32> to vector<8x64xf32>
    %344 = arith.mulf %342, %343 : vector<8x64xf32>
    %345 = arith.addf %341, %344 : vector<8x64xf32>
    %346 = vector.extract_strided_slice %339 {offsets = [0, 128], sizes = [8, 64], strides = [1, 1]} : vector<8x192xf32> to vector<8x64xf32>
    %347 = math.tanh %345 : vector<8x64xf32>
    %348 = arith.mulf %346, %347 : vector<8x64xf32>
    %349 = tpu.concatenate %331, %348 in 1 : vector<8x64xf32>, vector<8x64xf32> -> vector<8x128xf32>
    %c1_i32_94 = arith.constant 1 : i32
    %350 = arith.subi %c7_i32, %c1_i32_94 : i32
    %c8_i32_95 = arith.constant 8 : i32
    %351 = arith.muli %350, %c8_i32_95 : i32
    %352 = tpu.assume_multiple %351, 8 : i32
    %353 = arith.index_cast %352 : i32 to index
    %c0_96 = arith.constant 0 : index
    %354 = vector.load %arg5[%353, %c0_96] : memref<64x128xf32, #tpu.memory_space<vmem>>, vector<8x128xf32>
    tpu.vector_store %arg5[%353, %c0_96], %349 {strides = array<i32>} : memref<64x128xf32, #tpu.memory_space<vmem>>, vector<8x128xf32>,
    %c7_i32_97 = arith.constant 7 : i32
    %355 = arith.truncf %349 : vector<8x128xf32> to vector<8x128xbf16>
    %c0_98 = arith.constant 0 : index
    %c256 = arith.constant 256 : index
    %356 = vector.load %arg3[%c0_98, %c256] : memref<128x512xbf16, #tpu.memory_space<vmem>>, vector<128x256xbf16>
    %cst_99 = arith.constant dense<0.000000e+00> : vector<8x256xf32>
    %357 = tpu.matmul %355, %356, %cst_99 {dimension_numbers = #tpu.dot_dimension_numbers<[1], [0], [0], [1], [0, 0, 1, 1], [], []>} : vector<8x128xbf16>, vector<128x256xbf16>, vector<8x256xf32> -> vector<8x256xf32>
    %358 = arith.addf %357, %7 : vector<8x256xf32>
    %359 = math.tanh %358 : vector<8x256xf32>
    %360 = vector.extract_strided_slice %359 {offsets = [0, 0], sizes = [8, 192], strides = [1, 1]} : vector<8x256xf32> to vector<8x192xf32>
    %cst_100 = arith.constant 5.000000e-01 : f32
    %361 = vector.broadcast %cst_100 : f32 to vector<8x192xf32>
    %362 = arith.mulf %360, %361 : vector<8x192xf32>
    %cst_101 = arith.constant 5.000000e-01 : f32
    %363 = vector.broadcast %cst_101 : f32 to vector<8x192xf32>
    %364 = arith.addf %362, %363 : vector<8x192xf32>
    %365 = vector.extract_strided_slice %364 {offsets = [0, 64], sizes = [8, 64], strides = [1, 1]} : vector<8x192xf32> to vector<8x64xf32>
    %366 = arith.mulf %365, %345 : vector<8x64xf32>
    %367 = vector.extract_strided_slice %364 {offsets = [0, 0], sizes = [8, 64], strides = [1, 1]} : vector<8x192xf32> to vector<8x64xf32>
    %368 = vector.extract_strided_slice %359 {offsets = [0, 192], sizes = [8, 64], strides = [1, 1]} : vector<8x256xf32> to vector<8x64xf32>
    %369 = arith.mulf %367, %368 : vector<8x64xf32>
    %370 = arith.addf %366, %369 : vector<8x64xf32>
    %371 = vector.extract_strided_slice %364 {offsets = [0, 128], sizes = [8, 64], strides = [1, 1]} : vector<8x192xf32> to vector<8x64xf32>
    %372 = math.tanh %370 : vector<8x64xf32>
    %373 = arith.mulf %371, %372 : vector<8x64xf32>
    %374 = vector.extract_strided_slice %349 {offsets = [0, 0], sizes = [8, 64], strides = [1, 1]} : vector<8x128xf32> to vector<8x64xf32>
    %375 = tpu.concatenate %374, %373 in 1 : vector<8x64xf32>, vector<8x64xf32> -> vector<8x128xf32>
    %c56 = arith.constant 56 : index
    %c0_102 = arith.constant 0 : index
    %376 = vector.load %arg5[%c56, %c0_102] : memref<64x128xf32, #tpu.memory_space<vmem>>, vector<8x128xf32>
    tpu.vector_store %arg5[%c56, %c0_102], %375 {strides = array<i32>} : memref<64x128xf32, #tpu.memory_space<vmem>>, vector<8x128xf32>,
    return
  }
}

</mosaic_0001>

<llo_original>
// kernel: tpu_custom_call.1
$region0: #{tpu_custom_call.1}
  #allocation0 [shape = 'u32[]', space=smem, size = 0x4, offset = 0x4, fixed_abs, tag = 'smem constant byte address 0x4 - core index']
  #allocation1 [shape = 'u32[144,128]{1,0:T(1,128)}', space=vmem, size = 0x12000, scoped, tag = 'internal scratch']
  #allocation2 [shape = 'f32[64,256]{1,0:T(8,128)}', space=vmem, size = 0x10000, scoped, tag = 'scratch operand']
  %s0 = inlined_call_operand.vmem [shape: f32[64,2], index: 0, kind: input, shape index: {}]
  %s1 = inlined_call_operand.vmem [shape: f32[2,256], index: 1, kind: input, shape index: {}]
  %s2 = inlined_call_operand.vmem [shape: f32[1,256], index: 2, kind: input, shape index: {}]
  %s3 = inlined_call_operand.hbm [shape: bf16[128,512], index: 3, kind: input, shape index: {}]
  %s4 = inlined_call_operand.vmem [shape: f32[8,256], index: 4, kind: input, shape index: {}]
  %s5 = inlined_call_operand.hbm [shape: f32[64,128], index: 5, kind: output, shape index: {}]
  %s6 = sld [smem:[#allocation0]]
  $region34: #{tpu_custom_call.1} parent=0
    _
  %s8 = ssub.s32 1, %s6
  %s9 = scalar_select 0, %s8, %s6
  $region1: #{tpu_custom_call.1} parent=0
    #allocation3 [shape = 'u8[131072]{0}', space=vmem, size = 0x20000, scoped, tag = 'input window, operand 3, single buffered']
    #allocation4 [shape = 's32[1]{0}', space=sflag, size = 0x4, scoped, tag = 'scoped memory for tpu_custom_call.1']
    #allocation5 [shape = 's32[1]{0}', space=sflag, size = 0x4, scoped, tag = 'scoped memory for tpu_custom_call.1']
    #allocation6 [shape = 'u8[32768]{0}', space=vmem, size = 0x8000, scoped, tag = 'output window, operand 0, single buffered']
    %10 = vsyncpa [#allocation4], 0
    %11 = vsyncpa [#allocation5], 0
    // Predicated region
    $region2: #{tpu_custom_call.1} parent=1 // pred_check
      _
    $region3: #{tpu_custom_call.1} parent=1 // pred_check_branch
      %13 = sbr.rel (0) target = $region5
    $region4: #{tpu_custom_call.1} parent=1 // pred_region
      _
    $region5: #{tpu_custom_call.1} parent=1 // pred_fallthru
      _
    // Predicated region
    $region6: #{tpu_custom_call.1} parent=1 // pred_check
      _
    $region7: #{tpu_custom_call.1} parent=1 // pred_check_branch
      %15 = sbr.rel (0) target = $region9
    $region8: #{tpu_custom_call.1} parent=1 // pred_region
      _
    $region9: #{tpu_custom_call.1} parent=1 // pred_fallthru
      _
    // Predicated region
    $region10: #{tpu_custom_call.1} parent=1 // pred_check
      _
    $region11: #{tpu_custom_call.1} parent=1 // pred_check_branch
      %17 = sbr.rel (0) target = $region13
    $region12: #{tpu_custom_call.1} parent=1 // pred_region
      _
    $region13: #{tpu_custom_call.1} parent=1 // pred_fallthru
      _
    // Predicated region
    $region14: #{tpu_custom_call.1} parent=1 // pred_check
      _
    $region15: #{tpu_custom_call.1} parent=1 // pred_check_branch
      %19 = sbr.rel (0) target = $region17
    $region16: #{tpu_custom_call.1} parent=1 // pred_region
      %s21 = ssub.s32 4096, 4096
      %22 = vsyncadd [#allocation4], %s21
      %s23 = sshll.u32 [#allocation3], 4
      %s24 = int_to_ptr.vmem [resolvable:$true] %s23
      %29 = dma.hbm_to_vmem [thread:$0]  %s3, 4096, %s24, [#allocation4], 256, 256, 16
    $region17: #{tpu_custom_call.1} parent=1 // pred_fallthru
      _
    // Predicated region
    $region18: #{tpu_custom_call.1} parent=1 // pred_check
      _
    $region19: #{tpu_custom_call.1} parent=1 // pred_check_branch
      %31 = sbr.rel (0) target = $region21
    $region20: #{tpu_custom_call.1} parent=1 // pred_region
      _
    $region21: #{tpu_custom_call.1} parent=1 // pred_fallthru
      _
    // Predicated region
    $region22: #{tpu_custom_call.1} parent=1 // pred_check
      _
    $region23: #{tpu_custom_call.1} parent=1 // pred_check_branch
      %33 = sbr.rel (0) target = $region25
    $region24: #{tpu_custom_call.1} parent=1 // pred_region
      %34 = dma.done [#allocation4], 4096
    $region25: #{tpu_custom_call.1} parent=1 // pred_fallthru
      _
    %v36 = vld [vmem:[%s0] sm:$0xff]
    %v37 = vld [vmem:[%s0 + $0x8] sm:$0xff]
    %v38 = vld [vmem:[%s0 + $0x10] sm:$0xff]
    %v39 = vld [vmem:[%s0 + $0x18] sm:$0xff]
    %v40 = vld [vmem:[%s0 + $0x20] sm:$0xff]
    %v41 = vld [vmem:[%s0 + $0x28] sm:$0xff]
    %v42 = vld [vmem:[%s0 + $0x30] sm:$0xff]
    %v43 = vld [vmem:[%s0 + $0x38] sm:$0xff]
    %v44 = vld [vmem:[%s1] sm:$0xf]
    %v45 = vld [vmem:[%s2] sm:$0x3]
    %v47 = vlaneseq
    %v48 = vshrl.u32 %v47, 7
    %v49 = vsub.s32 0, %v48
    %v50 = vrot.slane %v45, %v49
    %v51 = vlaneseq
    %v52 = vshrl.u32 %v51, 7
    %v53 = vsub.s32 1, %v52
    %v54 = vrot.slane %v45, %v53
    %v59 = vunpack.c.l.s4 1983009808
    %v60 = vunpack.c.0.s8 %v59
    %v61 = vlaneseq
    %v62 = vshrl.u32 %v61, 7
    %v63 = vsub.s32 %v60, %v62
    %v64 = vrot.slane %v44, %v63
    %v65 = vcombine.high %v64, %v64
    %vm66 = vcmask 15360
    %v68 = vsel %vm66, %v36, 0
    %v71 = vsel %vm66, %v37, 0
    %v74 = vsel %vm66, %v38, 0
    %v77 = vsel %vm66, %v39, 0
    %v80 = vsel %vm66, %v40, 0
    %v83 = vsel %vm66, %v41, 0
    %v86 = vsel %vm66, %v42, 0
    %v89 = vsel %vm66, %v43, 0
    %vm91 = vcmask 1041408
    %v92 = vsel %vm91, %v64, 0
    %v94 = vsel %vm91, %v65, 0
    %96 = vmatprep.subr.mxu0 %v94
    %97 = vmatpush1.msra.mxu0 %v92
    %98 = vmatprep.subr.mxu0 0.0
    %99 = vmatpush1.msra.mxu0 0.0
    %100 = vmatprep.subr.mxu0 0.0
    %101 = vmatpush1.msra.mxu0 0.0
    %102 = vmatprep.subr.mxu0 0.0
    %103 = vmatpush1.msra.mxu0 0.0
    %104 = vmatprep.subr.mxu0 0.0
    %105 = vmatpush1.msra.mxu0 0.0
    %106 = vmatprep.subr.mxu0 0.0
    %107 = vmatpush1.msra.mxu0 0.0
    %108 = vmatprep.subr.mxu0 0.0
    %109 = vmatpush1.msra.mxu0 0.0
    %110 = vmatprep.subr.mxu0 0.0
    %111 = vmatpush1.msra.mxu0 0.0
    %112 = vmatprep.subr.mxu0 0.0
    %113 = vmatpush1.msra.mxu0 0.0
    %114 = vmatprep.subr.mxu0 0.0
    %115 = vmatpush1.msra.mxu0 0.0
    %116 = vmatprep.subr.mxu0 0.0
    %117 = vmatpush1.msra.mxu0 0.0
    %118 = vmatprep.subr.mxu0 0.0
    %119 = vmatpush1.msra.mxu0 0.0
    %120 = vmatprep.subr.mxu0 0.0
    %121 = vmatpush1.msra.mxu0 0.0
    %122 = vmatprep.subr.mxu0 0.0
    %123 = vmatpush1.msra.mxu0 0.0
    %124 = vmatprep.subr.mxu0 0.0
    %125 = vmatpush1.msra.mxu0 0.0
    %126 = vmatprep.subr.mxu0 0.0
    %127 = vmatpush1.msra.mxu0 0.0
    %128 = vmatprep.subr.mxu0 0.0
    %129 = vmatpush1.msra.mxu0 0.0
    %130 = vmatprep.subr.mxu0 0.0
    %131 = vmatpush1.msra.mxu0 0.0
    %132 = vmatprep.subr.mxu0 0.0
    %133 = vmatpush1.msra.mxu0 0.0
    %134 = vmatprep.subr.mxu0 0.0
    %135 = vmatpush1.msra.mxu0 0.0
    %136 = vmatprep.subr.mxu0 0.0
    %137 = vmatpush1.msra.mxu0 0.0
    %138 = vmatprep.subr.mxu0 0.0
    %139 = vmatpush1.msra.mxu0 0.0
    %140 = vmatprep.subr.mxu0 0.0
    %141 = vmatpush1.msra.mxu0 0.0
    %142 = vmatprep.subr.mxu0 0.0
    %143 = vmatpush1.msra.mxu0 0.0
    %144 = vmatprep.subr.mxu0 0.0
    %145 = vmatpush1.msra.mxu0 0.0
    %146 = vmatprep.subr.mxu0 0.0
    %147 = vmatpush1.msra.mxu0 0.0
    %148 = vmatprep.subr.mxu0 0.0
    %149 = vmatpush1.msra.mxu0 0.0
    %150 = vmatprep.subr.mxu0 0.0
    %151 = vmatpush1.msra.mxu0 0.0
    %152 = vmatprep.subr.mxu0 0.0
    %153 = vmatpush1.msra.mxu0 0.0
    %154 = vmatprep.subr.mxu0 0.0
    %155 = vmatpush1.msra.mxu0 0.0
    %156 = vmatprep.subr.mxu0 0.0
    %157 = vmatpush1.msra.mxu0 0.0
    %158 = vmatprep.subr.mxu0 0.0
    %159 = vmatpush1.msra.mxu0 0.0
    %160 = vmatprep.mubr.f32.mxu0 0.0
    %161 = vmatmul.mubr.f32.gmra.mrb[0].mxu0 %v68
    %v162 = vpop.f32.mrb[0].mxu0
    %v163 = vadd.f32 %v50, %v162
    %v164 = vpop.f32.mrb[0].mxu0
    %v165 = vadd.f32 %v54, %v164
    %166 = vmatprep.mubr.f32.mxu0 0.0
    %167 = vmatmul.mubr.f32.gmra.mrb[0].mxu0 %v71
    %v168 = vpop.f32.mrb[0].mxu0
    %v169 = vadd.f32 %v50, %v168
    %v170 = vpop.f32.mrb[0].mxu0
    %v171 = vadd.f32 %v54, %v170
    %172 = vmatprep.mubr.f32.mxu0 0.0
    %173 = vmatmul.mubr.f32.gmra.mrb[0].mxu0 %v74
    %v174 = vpop.f32.mrb[0].mxu0
    %v175 = vadd.f32 %v50, %v174
    %v176 = vpop.f32.mrb[0].mxu0
    %v177 = vadd.f32 %v54, %v176
    %178 = vmatprep.mubr.f32.mxu0 0.0
    %179 = vmatmul.mubr.f32.gmra.mrb[0].mxu0 %v77
    %v180 = vpop.f32.mrb[0].mxu0
    %v181 = vadd.f32 %v50, %v180
    %v182 = vpop.f32.mrb[0].mxu0
    %v183 = vadd.f32 %v54, %v182
    %184 = vmatprep.mubr.f32.mxu0 0.0
    %185 = vmatmul.mubr.f32.gmra.mrb[0].mxu0 %v80
    %v186 = vpop.f32.mrb[0].mxu0
    %v187 = vadd.f32 %v50, %v186
    %v188 = vpop.f32.mrb[0].mxu0
    %v189 = vadd.f32 %v54, %v188
    %190 = vmatprep.mubr.f32.mxu0 0.0
    %191 = vmatmul.mubr.f32.gmra.mrb[0].mxu0 %v83
    %v192 = vpop.f32.mrb[0].mxu0
    %v193 = vadd.f32 %v50, %v192
    %v194 = vpop.f32.mrb[0].mxu0
    %v195 = vadd.f32 %v54, %v194
    %196 = vmatprep.mubr.f32.mxu0 0.0
    %197 = vmatmul.mubr.f32.gmra.mrb[0].mxu0 %v86
    %v198 = vpop.f32.mrb[0].mxu0
    %v199 = vadd.f32 %v50, %v198
    %v200 = vpop.f32.mrb[0].mxu0
    %v201 = vadd.f32 %v54, %v200
    %202 = vmatprep.mubr.f32.mxu0 0.0
    %203 = vmatmul.mubr.f32.gmra.mrb[0].mxu0 %v89
    %v204 = vpop.f32.mrb[0].mxu0
    %v205 = vadd.f32 %v50, %v204
    %v206 = vpop.f32.mrb[0].mxu0
    %v207 = vadd.f32 %v54, %v206
    %208 = vdwg.mxu0
    %209 = vst [vmem:[#allocation2] sm:$0xff] %v163
    %210 = vst [vmem:[#allocation2 + $0x8] sm:$0xff] %v165
    %211 = vst [vmem:[#allocation2 + $0x10] sm:$0xff] %v169
    %212 = vst [vmem:[#allocation2 + $0x18] sm:$0xff] %v171
    %213 = vst [vmem:[#allocation2 + $0x20] sm:$0xff] %v175
    %214 = vst [vmem:[#allocation2 + $0x28] sm:$0xff] %v177
    %215 = vst [vmem:[#allocation2 + $0x30] sm:$0xff] %v181
    %216 = vst [vmem:[#allocation2 + $0x38] sm:$0xff] %v183
    %217 = vst [vmem:[#allocation2 + $0x40] sm:$0xff] %v187
    %218 = vst [vmem:[#allocation2 + $0x48] sm:$0xff] %v189
    %219 = vst [vmem:[#allocation2 + $0x50] sm:$0xff] %v193
    %220 = vst [vmem:[#allocation2 + $0x58] sm:$0xff] %v195
    %221 = vst [vmem:[#allocation2 + $0x60] sm:$0xff] %v199
    %222 = vst [vmem:[#allocation2 + $0x68] sm:$0xff] %v201
    %223 = vst [vmem:[#allocation2 + $0x70] sm:$0xff] %v205
    %224 = vst [vmem:[#allocation2 + $0x78] sm:$0xff] %v207
    %v225 = vld [vmem:[%s4] sm:$0xff]
    %v226 = vld [vmem:[%s4 + $0x8] sm:$0xff]
    %v227 = vld [vmem:[#allocation2] sm:$0xff]
    %v228 = vld [vmem:[#allocation2 + $0x8] sm:$0xff]
    %v229 = vtanh.pop %v227
    %v230 = vtanh.pop %v228
    %v231 = vmul.f32 %v229, 0.5
    %v232 = vmul.f32 %v230, 0.5
    %v233 = vadd.f32 %v231, 0.5
    %v234 = vadd.f32 %v232, 0.5
    %v235 = vmul.f32 %v233, 0.0
    %237 = vrot.lane.b32.xlu0 %v230, 64
    %v238 = vpop.permute.xlu0 %237
    %v240 = vmul.f32 %v233, %v238
    %242 = vrot.lane.b32.xlu0 %v240, 64
    %v243 = vpop.permute.xlu0 %242
    %v245 = vadd.f32 %v235, %v243
    %v246 = vtanh.pop %v245
    %248 = vrot.lane.b32.xlu0 %v246, 64
    %v249 = vpop.permute.xlu0 %248
    %v251 = vmul.f32 %v234, %v249
    %vm252 = vcmask 523264
    %v253 = vsel %vm252, %v251, 0.0
    %v254 = vpack.c.bf16 %v253, %v253
    %v255 = vld [vmem:[#allocation3] sm:$0xff]
    %v256 = vld [vmem:[#allocation3 + $0x8] sm:$0xff]
    %v257 = vld [vmem:[#allocation3 + $0x10] sm:$0xff]
    %v258 = vld [vmem:[#allocation3 + $0x18] sm:$0xff]
    %v259 = vld [vmem:[#allocation3 + $0x20] sm:$0xff]
    %v260 = vld [vmem:[#allocation3 + $0x28] sm:$0xff]
    %v261 = vld [vmem:[#allocation3 + $0x30] sm:$0xff]
    %v262 = vld [vmem:[#allocation3 + $0x38] sm:$0xff]
    %v263 = vld [vmem:[#allocation3 + $0x40] sm:$0xff]
    %v264 = vld [vmem:[#allocation3 + $0x48] sm:$0xff]
    %v265 = vld [vmem:[#allocation3 + $0x50] sm:$0xff]
    %v266 = vld [vmem:[#allocation3 + $0x58] sm:$0xff]
    %v267 = vld [vmem:[#allocation3 + $0x60] sm:$0xff]
    %v268 = vld [vmem:[#allocation3 + $0x68] sm:$0xff]
    %v269 = vld [vmem:[#allocation3 + $0x70] sm:$0xff]
    %v270 = vld [vmem:[#allocation3 + $0x78] sm:$0xff]
    %v271 = vld [vmem:[#allocation3 + $0x80] sm:$0xff]
    %v272 = vld [vmem:[#allocation3 + $0x88] sm:$0xff]
    %v273 = vld [vmem:[#allocation3 + $0x90] sm:$0xff]
    %v274 = vld [vmem:[#allocation3 + $0x98] sm:$0xff]
    %v275 = vld [vmem:[#allocation3 + $0xa0] sm:$0xff]
    %v276 = vld [vmem:[#allocation3 + $0xa8] sm:$0xff]
    %v277 = vld [vmem:[#allocation3 + $0xb0] sm:$0xff]
    %v278 = vld [vmem:[#allocation3 + $0xb8] sm:$0xff]
    %v279 = vld [vmem:[#allocation3 + $0xc0] sm:$0xff]
    %v280 = vld [vmem:[#allocation3 + $0xc8] sm:$0xff]
    %v281 = vld [vmem:[#allocation3 + $0xd0] sm:$0xff]
    %v282 = vld [vmem:[#allocation3 + $0xd8] sm:$0xff]
    %v283 = vld [vmem:[#allocation3 + $0xe0] sm:$0xff]
    %v284 = vld [vmem:[#allocation3 + $0xe8] sm:$0xff]
    %v285 = vld [vmem:[#allocation3 + $0xf0] sm:$0xff]
    %v286 = vld [vmem:[#allocation3 + $0xf8] sm:$0xff]
    %v319 = vunpack.c.l.b16 %v255
    %v320 = vunpack.c.h.b16 %v255
    %v321 = vunpack.c.l.b16 %v256
    %v322 = vunpack.c.h.b16 %v256
    %v323 = vunpack.c.l.b16 %v257
    %v324 = vunpack.c.h.b16 %v257
    %v325 = vunpack.c.l.b16 %v258
    %v326 = vunpack.c.h.b16 %v258
    %v327 = vunpack.c.l.b16 %v259
    %v328 = vunpack.c.h.b16 %v259
    %v329 = vunpack.c.l.b16 %v260
    %v330 = vunpack.c.h.b16 %v260
    %v331 = vunpack.c.l.b16 %v261
    %v332 = vunpack.c.h.b16 %v261
    %v333 = vunpack.c.l.b16 %v262
    %v334 = vunpack.c.h.b16 %v262
    %v335 = vunpack.c.l.b16 %v263
    %v336 = vunpack.c.h.b16 %v263
    %v337 = vunpack.c.l.b16 %v264
    %v338 = vunpack.c.h.b16 %v264
    %v339 = vunpack.c.l.b16 %v265
    %v340 = vunpack.c.h.b16 %v265
    %v341 = vunpack.c.l.b16 %v266
    %v342 = vunpack.c.h.b16 %v266
    %v343 = vunpack.c.l.b16 %v267
    %v344 = vunpack.c.h.b16 %v267
    %v345 = vunpack.c.l.b16 %v268
    %v346 = vunpack.c.h.b16 %v268
    %v347 = vunpack.c.l.b16 %v269
    %v348 = vunpack.c.h.b16 %v269
    %v349 = vunpack.c.l.b16 %v270
    %v350 = vunpack.c.h.b16 %v270
    %v351 = vunpack.c.l.b16 %v271
    %v352 = vunpack.c.h.b16 %v271
    %v353 = vunpack.c.l.b16 %v272
    %v354 = vunpack.c.h.b16 %v272
    %v355 = vunpack.c.l.b16 %v273
    %v356 = vunpack.c.h.b16 %v273
    %v357 = vunpack.c.l.b16 %v274
    %v358 = vunpack.c.h.b16 %v274
    %v359 = vunpack.c.l.b16 %v275
    %v360 = vunpack.c.h.b16 %v275
    %v361 = vunpack.c.l.b16 %v276
    %v362 = vunpack.c.h.b16 %v276
    %v363 = vunpack.c.l.b16 %v277
    %v364 = vunpack.c.h.b16 %v277
    %v365 = vunpack.c.l.b16 %v278
    %v366 = vunpack.c.h.b16 %v278
    %v367 = vunpack.c.l.b16 %v279
    %v368 = vunpack.c.h.b16 %v279
    %v369 = vunpack.c.l.b16 %v280
    %v370 = vunpack.c.h.b16 %v280
    %v371 = vunpack.c.l.b16 %v281
    %v372 = vunpack.c.h.b16 %v281
    %v373 = vunpack.c.l.b16 %v282
    %v374 = vunpack.c.h.b16 %v282
    %v375 = vunpack.c.l.b16 %v283
    %v376 = vunpack.c.h.b16 %v283
    %v377 = vunpack.c.l.b16 %v284
    %v378 = vunpack.c.h.b16 %v284
    %v379 = vunpack.c.l.b16 %v285
    %v380 = vunpack.c.h.b16 %v285
    %v381 = vunpack.c.l.b16 %v286
    %v382 = vunpack.c.h.b16 %v286
    %v383 = vpack.c.b16 %v323, %v319
    %v384 = vpack.c.b16 %v324, %v320
    %v385 = vpack.c.b16 %v325, %v321
    %v386 = vpack.c.b16 %v326, %v322
    %v387 = vpack.c.b16 %v331, %v327
    %v388 = vpack.c.b16 %v332, %v328
    %v389 = vpack.c.b16 %v333, %v329
    %v390 = vpack.c.b16 %v334, %v330
    %v391 = vpack.c.b16 %v339, %v335
    %v392 = vpack.c.b16 %v340, %v336
    %v393 = vpack.c.b16 %v341, %v337
    %v394 = vpack.c.b16 %v342, %v338
    %v395 = vpack.c.b16 %v347, %v343
    %v396 = vpack.c.b16 %v348, %v344
    %v397 = vpack.c.b16 %v349, %v345
    %v398 = vpack.c.b16 %v350, %v346
    %v399 = vpack.c.b16 %v355, %v351
    %v400 = vpack.c.b16 %v356, %v352
    %v401 = vpack.c.b16 %v357, %v353
    %v402 = vpack.c.b16 %v358, %v354
    %v403 = vpack.c.b16 %v363, %v359
    %v404 = vpack.c.b16 %v364, %v360
    %v405 = vpack.c.b16 %v365, %v361
    %v406 = vpack.c.b16 %v366, %v362
    %v407 = vpack.c.b16 %v371, %v367
    %v408 = vpack.c.b16 %v372, %v368
    %v409 = vpack.c.b16 %v373, %v369
    %v410 = vpack.c.b16 %v374, %v370
    %v411 = vpack.c.b16 %v379, %v375
    %v412 = vpack.c.b16 %v380, %v376
    %v413 = vpack.c.b16 %v381, %v377
    %v414 = vpack.c.b16 %v382, %v378
    %447 = vmatprep.subr.bf16.mxu0 %v384
    %448 = vmatpush1.bf16.msra.mxu0 %v383
    %449 = vmatprep.subr.bf16.mxu0 %v388
    %450 = vmatpush1.bf16.msra.mxu0 %v387
    %451 = vmatprep.subr.bf16.mxu0 %v392
    %452 = vmatpush1.bf16.msra.mxu0 %v391
    %453 = vmatprep.subr.bf16.mxu0 %v396
    %454 = vmatpush1.bf16.msra.mxu0 %v395
    %455 = vmatprep.subr.bf16.mxu0 %v400
    %456 = vmatpush1.bf16.msra.mxu0 %v399
    %457 = vmatprep.subr.bf16.mxu0 %v404
    %458 = vmatpush1.bf16.msra.mxu0 %v403
    %459 = vmatprep.subr.bf16.mxu0 %v408
    %460 = vmatpush1.bf16.msra.mxu0 %v407
    %461 = vmatprep.subr.bf16.mxu0 %v412
    %462 = vmatpush1.bf16.msra.mxu0 %v411
    %463 = vmatprep.subr.bf16.mxu0 0
    %464 = vmatpush1.bf16.msra.mxu0 0
    %465 = vmatprep.subr.bf16.mxu0 0
    %466 = vmatpush1.bf16.msra.mxu0 0
    %467 = vmatprep.subr.bf16.mxu0 0
    %468 = vmatpush1.bf16.msra.mxu0 0
    %469 = vmatprep.subr.bf16.mxu0 0
    %470 = vmatpush1.bf16.msra.mxu0 0
    %471 = vmatprep.subr.bf16.mxu0 0
    %472 = vmatpush1.bf16.msra.mxu0 0
    %473 = vmatprep.subr.bf16.mxu0 0
    %474 = vmatpush1.bf16.msra.mxu0 0
    %475 = vmatprep.subr.bf16.mxu0 0
    %476 = vmatpush1.bf16.msra.mxu0 0
    %477 = vmatprep.subr.bf16.mxu0 0
    %478 = vmatpush1.bf16.msra.mxu0 0
    %479 = vmatprep.mubr.bf16.mxu0 0
    %480 = vmatmul.mubr.bf16.gmra.mrb[0].mxu0 %v254
    %v481 = vpop.f32.mrb[0].mxu0
    %v482 = vadd.f32 0.0, %v481
    %v483 = vpop.f32.mrb[0].mxu0
    %v484 = vadd.f32 0.0, %v483
    %v485 = vpop.f32.mrb[0].mxu0
    %v486 = vpop.f32.mrb[0].mxu0
    %487 = vdwg.mxu0
    %488 = vmatprep.subr.bf16.mxu0 %v386
    %489 = vmatpush1.bf16.msra.mxu0 %v385
    %490 = vmatprep.subr.bf16.mxu0 %v390
    %491 = vmatpush1.bf16.msra.mxu0 %v389
    %492 = vmatprep.subr.bf16.mxu0 %v394
    %493 = vmatpush1.bf16.msra.mxu0 %v393
    %494 = vmatprep.subr.bf16.mxu0 %v398
    %495 = vmatpush1.bf16.msra.mxu0 %v397
    %496 = vmatprep.subr.bf16.mxu0 %v402
    %497 = vmatpush1.bf16.msra.mxu0 %v401
    %498 = vmatprep.subr.bf16.mxu0 %v406
    %499 = vmatpush1.bf16.msra.mxu0 %v405
    %500 = vmatprep.subr.bf16.mxu0 %v410
    %501 = vmatpush1.bf16.msra.mxu0 %v409
    %502 = vmatprep.subr.bf16.mxu0 %v414
    %503 = vmatpush1.bf16.msra.mxu0 %v413
    %504 = vmatprep.subr.bf16.mxu0 0
    %505 = vmatpush1.bf16.msra.mxu0 0
    %506 = vmatprep.subr.bf16.mxu0 0
    %507 = vmatpush1.bf16.msra.mxu0 0
    %508 = vmatprep.subr.bf16.mxu0 0
    %509 = vmatpush1.bf16.msra.mxu0 0
    %510 = vmatprep.subr.bf16.mxu0 0
    %511 = vmatpush1.bf16.msra.mxu0 0
    %512 = vmatprep.subr.bf16.mxu0 0
    %513 = vmatpush1.bf16.msra.mxu0 0
    %514 = vmatprep.subr.bf16.mxu0 0
    %515 = vmatpush1.bf16.msra.mxu0 0
    %516 = vmatprep.subr.bf16.mxu0 0
    %517 = vmatpush1.bf16.msra.mxu0 0
    %518 = vmatprep.subr.bf16.mxu0 0
    %519 = vmatpush1.bf16.msra.mxu0 0
    %520 = vmatprep.mubr.bf16.mxu0 0
    %521 = vmatmul.mubr.bf16.gmra.mrb[0].mxu0 %v254
    %v522 = vpop.f32.mrb[0].mxu0
    %v523 = vadd.f32 0.0, %v522
    %v524 = vpop.f32.mrb[0].mxu0
    %v525 = vadd.f32 0.0, %v524
    %v526 = vpop.f32.mrb[0].mxu0
    %v527 = vpop.f32.mrb[0].mxu0
    %528 = vdwg.mxu0
    %s529 = smul.u32 1, 2
    %s530 = smul.addr %s529, 8
    %s531 = scalar_lea.vmem [#allocation2], %s530
    %v532 = vld [vmem:[%s531] sm:$0xff]
    %v533 = vld [vmem:[%s531 + $0x8] sm:$0xff]
    %v534 = vadd.f32 %v482, %v532
    %v535 = vadd.f32 %v484, %v533
    %v536 = vtanh.pop %v534
    %v537 = vtanh.pop %v535
    %v538 = vmul.f32 %v536, 0.5
    %v539 = vmul.f32 %v537, 0.5
    %v540 = vadd.f32 %v538, 0.5
    %v541 = vadd.f32 %v539, 0.5
    %v542 = vmul.f32 %v540, %v245
    %544 = vrot.lane.b32.xlu0 %v537, 64
    %v545 = vpop.permute.xlu0 %544
    %v547 = vmul.f32 %v540, %v545
    %549 = vrot.lane.b32.xlu0 %v547, 64
    %v550 = vpop.permute.xlu0 %549
    %v552 = vadd.f32 %v542, %v550
    %v553 = vtanh.pop %v552
    %555 = vrot.lane.b32.xlu0 %v553, 64
    %v556 = vpop.permute.xlu0 %555
    %v558 = vmul.f32 %v541, %v556
    %v559 = vadd.f32 %v523, %v225
    %v560 = vadd.f32 %v525, %v226
    %v561 = vtanh.pop %v559
    %v562 = vtanh.pop %v560
    %v563 = vmul.f32 %v561, 0.5
    %v564 = vmul.f32 %v562, 0.5
    %v565 = vadd.f32 %v563, 0.5
    %v566 = vadd.f32 %v564, 0.5
    %v567 = vmul.f32 %v565, 0.0
    %569 = vrot.lane.b32.xlu0 %v562, 64
    %v570 = vpop.permute.xlu0 %569
    %v572 = vmul.f32 %v565, %v570
    %574 = vrot.lane.b32.xlu0 %v572, 64
    %v575 = vpop.permute.xlu0 %574
    %v577 = vadd.f32 %v567, %v575
    %v578 = vtanh.pop %v577
    %580 = vrot.lane.b32.xlu0 %v578, 64
    %v581 = vpop.permute.xlu0 %580
    %v583 = vmul.f32 %v566, %v581
    %585 = vrot.lane.b32.xlu0 %v583, 64
    %v586 = vpop.permute.xlu0 %585
    %v588 = vsel %vm252, %v558, %v586
    %589 = vst [vmem:[#allocation6] sm:$0xff] %v588
    %v590 = vpack.c.bf16 %v588, %v588
    %v591 = vld [vmem:[#allocation3] sm:$0xff]
    %v592 = vld [vmem:[#allocation3 + $0x8] sm:$0xff]
    %v593 = vld [vmem:[#allocation3 + $0x10] sm:$0xff]
    %v594 = vld [vmem:[#allocation3 + $0x18] sm:$0xff]
    %v595 = vld [vmem:[#allocation3 + $0x20] sm:$0xff]
    %v596 = vld [vmem:[#allocation3 + $0x28] sm:$0xff]
    %v597 = vld [vmem:[#allocation3 + $0x30] sm:$0xff]
    %v598 = vld [vmem:[#allocation3 + $0x38] sm:$0xff]
    %v599 = vld [vmem:[#allocation3 + $0x40] sm:$0xff]
    %v600 = vld [vmem:[#allocation3 + $0x48] sm:$0xff]
    %v601 = vld [vmem:[#allocation3 + $0x50] sm:$0xff]
    %v602 = vld [vmem:[#allocation3 + $0x58] sm:$0xff]
    %v603 = vld [vmem:[#allocation3 + $0x60] sm:$0xff]
    %v604 = vld [vmem:[#allocation3 + $0x68] sm:$0xff]
    %v605 = vld [vmem:[#allocation3 + $0x70] sm:$0xff]
    %v606 = vld [vmem:[#allocation3 + $0x78] sm:$0xff]
    %v607 = vld [vmem:[#allocation3 + $0x80] sm:$0xff]
    %v608 = vld [vmem:[#allocation3 + $0x88] sm:$0xff]
    %v609 = vld [vmem:[#allocation3 + $0x90] sm:$0xff]
    %v610 = vld [vmem:[#allocation3 + $0x98] sm:$0xff]
    %v611 = vld [vmem:[#allocation3 + $0xa0] sm:$0xff]
    %v612 = vld [vmem:[#allocation3 + $0xa8] sm:$0xff]
    %v613 = vld [vmem:[#allocation3 + $0xb0] sm:$0xff]
    %v614 = vld [vmem:[#allocation3 + $0xb8] sm:$0xff]
    %v615 = vld [vmem:[#allocation3 + $0xc0] sm:$0xff]
    %v616 = vld [vmem:[#allocation3 + $0xc8] sm:$0xff]
    %v617 = vld [vmem:[#allocation3 + $0xd0] sm:$0xff]
    %v618 = vld [vmem:[#allocation3 + $0xd8] sm:$0xff]
    %v619 = vld [vmem:[#allocation3 + $0xe0] sm:$0xff]
    %v620 = vld [vmem:[#allocation3 + $0xe8] sm:$0xff]
    %v621 = vld [vmem:[#allocation3 + $0xf0] sm:$0xff]
    %v622 = vld [vmem:[#allocation3 + $0xf8] sm:$0xff]
    %v655 = vunpack.c.l.b16 %v591
    %v656 = vunpack.c.h.b16 %v591
    %v657 = vunpack.c.l.b16 %v592
    %v658 = vunpack.c.h.b16 %v592
    %v659 = vunpack.c.l.b16 %v593
    %v660 = vunpack.c.h.b16 %v593
    %v661 = vunpack.c.l.b16 %v594
    %v662 = vunpack.c.h.b16 %v594
    %v663 = vunpack.c.l.b16 %v595
    %v664 = vunpack.c.h.b16 %v595
    %v665 = vunpack.c.l.b16 %v596
    %v666 = vunpack.c.h.b16 %v596
    %v667 = vunpack.c.l.b16 %v597
    %v668 = vunpack.c.h.b16 %v597
    %v669 = vunpack.c.l.b16 %v598
    %v670 = vunpack.c.h.b16 %v598
    %v671 = vunpack.c.l.b16 %v599
    %v672 = vunpack.c.h.b16 %v599
    %v673 = vunpack.c.l.b16 %v600
    %v674 = vunpack.c.h.b16 %v600
    %v675 = vunpack.c.l.b16 %v601
    %v676 = vunpack.c.h.b16 %v601
    %v677 = vunpack.c.l.b16 %v602
    %v678 = vunpack.c.h.b16 %v602
    %v679 = vunpack.c.l.b16 %v603
    %v680 = vunpack.c.h.b16 %v603
    %v681 = vunpack.c.l.b16 %v604
    %v682 = vunpack.c.h.b16 %v604
    %v683 = vunpack.c.l.b16 %v605
    %v684 = vunpack.c.h.b16 %v605
    %v685 = vunpack.c.l.b16 %v606
    %v686 = vunpack.c.h.b16 %v606
    %v687 = vunpack.c.l.b16 %v607
    %v688 = vunpack.c.h.b16 %v607
    %v689 = vunpack.c.l.b16 %v608
    %v690 = vunpack.c.h.b16 %v608
    %v691 = vunpack.c.l.b16 %v609
    %v692 = vunpack.c.h.b16 %v609
    %v693 = vunpack.c.l.b16 %v610
    %v694 = vunpack.c.h.b16 %v610
    %v695 = vunpack.c.l.b16 %v611
    %v696 = vunpack.c.h.b16 %v611
    %v697 = vunpack.c.l.b16 %v612
    %v698 = vunpack.c.h.b16 %v612
    %v699 = vunpack.c.l.b16 %v613
    %v700 = vunpack.c.h.b16 %v613
    %v701 = vunpack.c.l.b16 %v614
    %v702 = vunpack.c.h.b16 %v614
    %v703 = vunpack.c.l.b16 %v615
    %v704 = vunpack.c.h.b16 %v615
    %v705 = vunpack.c.l.b16 %v616
    %v706 = vunpack.c.h.b16 %v616
    %v707 = vunpack.c.l.b16 %v617
    %v708 = vunpack.c.h.b16 %v617
    %v709 = vunpack.c.l.b16 %v618
    %v710 = vunpack.c.h.b16 %v618
    %v711 = vunpack.c.l.b16 %v619
    %v712 = vunpack.c.h.b16 %v619
    %v713 = vunpack.c.l.b16 %v620
    %v714 = vunpack.c.h.b16 %v620
    %v715 = vunpack.c.l.b16 %v621
    %v716 = vunpack.c.h.b16 %v621
    %v717 = vunpack.c.l.b16 %v622
    %v718 = vunpack.c.h.b16 %v622
    %v719 = vpack.c.b16 %v659, %v655
    %v720 = vpack.c.b16 %v660, %v656
    %v721 = vpack.c.b16 %v661, %v657
    %v722 = vpack.c.b16 %v662, %v658
    %v723 = vpack.c.b16 %v667, %v663
    %v724 = vpack.c.b16 %v668, %v664
    %v725 = vpack.c.b16 %v669, %v665
    %v726 = vpack.c.b16 %v670, %v666
    %v727 = vpack.c.b16 %v675, %v671
    %v728 = vpack.c.b16 %v676, %v672
    %v729 = vpack.c.b16 %v677, %v673
    %v730 = vpack.c.b16 %v678, %v674
    %v731 = vpack.c.b16 %v683, %v679
    %v732 = vpack.c.b16 %v684, %v680
    %v733 = vpack.c.b16 %v685, %v681
    %v734 = vpack.c.b16 %v686, %v682
    %v735 = vpack.c.b16 %v691, %v687
    %v736 = vpack.c.b16 %v692, %v688
    %v737 = vpack.c.b16 %v693, %v689
    %v738 = vpack.c.b16 %v694, %v690
    %v739 = vpack.c.b16 %v699, %v695
    %v740 = vpack.c.b16 %v700, %v696
    %v741 = vpack.c.b16 %v701, %v697
    %v742 = vpack.c.b16 %v702, %v698
    %v743 = vpack.c.b16 %v707, %v703
    %v744 = vpack.c.b16 %v708, %v704
    %v745 = vpack.c.b16 %v709, %v705
    %v746 = vpack.c.b16 %v710, %v706
    %v747 = vpack.c.b16 %v715, %v711
    %v748 = vpack.c.b16 %v716, %v712
    %v749 = vpack.c.b16 %v717, %v713
    %v750 = vpack.c.b16 %v718, %v714
    %783 = vmatprep.subr.bf16.mxu0 %v720
    %784 = vmatpush1.bf16.msra.mxu0 %v719
    %785 = vmatprep.subr.bf16.mxu0 %v724
    %786 = vmatpush1.bf16.msra.mxu0 %v723
    %787 = vmatprep.subr.bf16.mxu0 %v728
    %788 = vmatpush1.bf16.msra.mxu0 %v727
    %789 = vmatprep.subr.bf16.mxu0 %v732
    %790 = vmatpush1.bf16.msra.mxu0 %v731
    %791 = vmatprep.subr.bf16.mxu0 %v736
    %792 = vmatpush1.bf16.msra.mxu0 %v735
    %793 = vmatprep.subr.bf16.mxu0 %v740
    %794 = vmatpush1.bf16.msra.mxu0 %v739
    %795 = vmatprep.subr.bf16.mxu0 %v744
    %796 = vmatpush1.bf16.msra.mxu0 %v743
    %797 = vmatprep.subr.bf16.mxu0 %v748
    %798 = vmatpush1.bf16.msra.mxu0 %v747
    %799 = vmatprep.subr.bf16.mxu0 0
    %800 = vmatpush1.bf16.msra.mxu0 0
    %801 = vmatprep.subr.bf16.mxu0 0
    %802 = vmatpush1.bf16.msra.mxu0 0
    %803 = vmatprep.subr.bf16.mxu0 0
    %804 = vmatpush1.bf16.msra.mxu0 0
    %805 = vmatprep.subr.bf16.mxu0 0
    %806 = vmatpush1.bf16.msra.mxu0 0
    %807 = vmatprep.subr.bf16.mxu0 0
    %808 = vmatpush1.bf16.msra.mxu0 0
    %809 = vmatprep.subr.bf16.mxu0 0
    %810 = vmatpush1.bf16.msra.mxu0 0
    %811 = vmatprep.subr.bf16.mxu0 0
    %812 = vmatpush1.bf16.msra.mxu0 0
    %813 = vmatprep.subr.bf16.mxu0 0
    %814 = vmatpush1.bf16.msra.mxu0 0
    %815 = vmatprep.mubr.bf16.mxu0 0
    %816 = vmatmul.mubr.bf16.gmra.mrb[0].mxu0 %v590
    %v817 = vpop.f32.mrb[0].mxu0
    %v818 = vadd.f32 0.0, %v817
    %v819 = vpop.f32.mrb[0].mxu0
    %v820 = vadd.f32 0.0, %v819
    %v821 = vpop.f32.mrb[0].mxu0
    %v822 = vpop.f32.mrb[0].mxu0
    %823 = vdwg.mxu0
    %824 = vmatprep.subr.bf16.mxu0 %v722
    %825 = vmatpush1.bf16.msra.mxu0 %v721
    %826 = vmatprep.subr.bf16.mxu0 %v726
    %827 = vmatpush1.bf16.msra.mxu0 %v725
    %828 = vmatprep.subr.bf16.mxu0 %v730
    %829 = vmatpush1.bf16.msra.mxu0 %v729
    %830 = vmatprep.subr.bf16.mxu0 %v734
    %831 = vmatpush1.bf16.msra.mxu0 %v733
    %832 = vmatprep.subr.bf16.mxu0 %v738
    %833 = vmatpush1.bf16.msra.mxu0 %v737
    %834 = vmatprep.subr.bf16.mxu0 %v742
    %835 = vmatpush1.bf16.msra.mxu0 %v741
    %836 = vmatprep.subr.bf16.mxu0 %v746
    %837 = vmatpush1.bf16.msra.mxu0 %v745
    %838 = vmatprep.subr.bf16.mxu0 %v750
    %839 = vmatpush1.bf16.msra.mxu0 %v749
    %840 = vmatprep.subr.bf16.mxu0 0
    %841 = vmatpush1.bf16.msra.mxu0 0
    %842 = vmatprep.subr.bf16.mxu0 0
    %843 = vmatpush1.bf16.msra.mxu0 0
    %844 = vmatprep.subr.bf16.mxu0 0
    %845 = vmatpush1.bf16.msra.mxu0 0
    %846 = vmatprep.subr.bf16.mxu0 0
    %847 = vmatpush1.bf16.msra.mxu0 0
    %848 = vmatprep.subr.bf16.mxu0 0
    %849 = vmatpush1.bf16.msra.mxu0 0
    %850 = vmatprep.subr.bf16.mxu0 0
    %851 = vmatpush1.bf16.msra.mxu0 0
    %852 = vmatprep.subr.bf16.mxu0 0
    %853 = vmatpush1.bf16.msra.mxu0 0
    %854 = vmatprep.subr.bf16.mxu0 0
    %855 = vmatpush1.bf16.msra.mxu0 0
    %856 = vmatprep.mubr.bf16.mxu0 0
    %857 = vmatmul.mubr.bf16.gmra.mrb[0].mxu0 %v590
    %v858 = vpop.f32.mrb[0].mxu0
    %v859 = vadd.f32 0.0, %v858
    %v860 = vpop.f32.mrb[0].mxu0
    %v861 = vadd.f32 0.0, %v860
    %v862 = vpop.f32.mrb[0].mxu0
    %v863 = vpop.f32.mrb[0].mxu0
    %864 = vdwg.mxu0
    %s865 = smul.u32 2, 2
    %s866 = smul.addr %s865, 8
    %s867 = scalar_lea.vmem [#allocation2], %s866
    %v868 = vld [vmem:[%s867] sm:$0xff]
    %v869 = vld [vmem:[%s867 + $0x8] sm:$0xff]
    %v870 = vadd.f32 %v818, %v868
    %v871 = vadd.f32 %v820, %v869
    %v872 = vtanh.pop %v870
    %v873 = vtanh.pop %v871
    %v874 = vmul.f32 %v872, 0.5
    %v875 = vmul.f32 %v873, 0.5
    %v876 = vadd.f32 %v874, 0.5
    %v877 = vadd.f32 %v875, 0.5
    %v878 = vmul.f32 %v876, %v552
    %880 = vrot.lane.b32.xlu0 %v873, 64
    %v881 = vpop.permute.xlu0 %880
    %v883 = vmul.f32 %v876, %v881
    %885 = vrot.lane.b32.xlu0 %v883, 64
    %v886 = vpop.permute.xlu0 %885
    %v888 = vadd.f32 %v878, %v886
    %v889 = vtanh.pop %v888
    %891 = vrot.lane.b32.xlu0 %v889, 64
    %v892 = vpop.permute.xlu0 %891
    %v894 = vmul.f32 %v877, %v892
    %v895 = vadd.f32 %v859, %v225
    %v896 = vadd.f32 %v861, %v226
    %v897 = vtanh.pop %v895
    %v898 = vtanh.pop %v896
    %v899 = vmul.f32 %v897, 0.5
    %v900 = vmul.f32 %v898, 0.5
    %v901 = vadd.f32 %v899, 0.5
    %v902 = vadd.f32 %v900, 0.5
    %v903 = vmul.f32 %v901, %v577
    %905 = vrot.lane.b32.xlu0 %v898, 64
    %v906 = vpop.permute.xlu0 %905
    %v908 = vmul.f32 %v901, %v906
    %910 = vrot.lane.b32.xlu0 %v908, 64
    %v911 = vpop.permute.xlu0 %910
    %v913 = vadd.f32 %v903, %v911
    %v914 = vtanh.pop %v913
    %916 = vrot.lane.b32.xlu0 %v914, 64
    %v917 = vpop.permute.xlu0 %916
    %v919 = vmul.f32 %v902, %v917
    %921 = vrot.lane.b32.xlu0 %v919, 64
    %v922 = vpop.permute.xlu0 %921
    %v924 = vsel %vm252, %v894, %v922
    %s925 = scalar_lea.vmem [#allocation6], 8
    %926 = vst [vmem:[%s925] sm:$0xff] %v924
    %v927 = vpack.c.bf16 %v924, %v924
    %v928 = vld [vmem:[#allocation3] sm:$0xff]
    %v929 = vld [vmem:[#allocation3 + $0x8] sm:$0xff]
    %v930 = vld [vmem:[#allocation3 + $0x10] sm:$0xff]
    %v931 = vld [vmem:[#allocation3 + $0x18] sm:$0xff]
    %v932 = vld [vmem:[#allocation3 + $0x20] sm:$0xff]
    %v933 = vld [vmem:[#allocation3 + $0x28] sm:$0xff]
    %v934 = vld [vmem:[#allocation3 + $0x30] sm:$0xff]
    %v935 = vld [vmem:[#allocation3 + $0x38] sm:$0xff]
    %v936 = vld [vmem:[#allocation3 + $0x40] sm:$0xff]
    %v937 = vld [vmem:[#allocation3 + $0x48] sm:$0xff]
    %v938 = vld [vmem:[#allocation3 + $0x50] sm:$0xff]
    %v939 = vld [vmem:[#allocation3 + $0x58] sm:$0xff]
    %v940 = vld [vmem:[#allocation3 + $0x60] sm:$0xff]
    %v941 = vld [vmem:[#allocation3 + $0x68] sm:$0xff]
    %v942 = vld [vmem:[#allocation3 + $0x70] sm:$0xff]
    %v943 = vld [vmem:[#allocation3 + $0x78] sm:$0xff]
    %v944 = vld [vmem:[#allocation3 + $0x80] sm:$0xff]
    %v945 = vld [vmem:[#allocation3 + $0x88] sm:$0xff]
    %v946 = vld [vmem:[#allocation3 + $0x90] sm:$0xff]
    %v947 = vld [vmem:[#allocation3 + $0x98] sm:$0xff]
    %v948 = vld [vmem:[#allocation3 + $0xa0] sm:$0xff]
    %v949 = vld [vmem:[#allocation3 + $0xa8] sm:$0xff]
    %v950 = vld [vmem:[#allocation3 + $0xb0] sm:$0xff]
    %v951 = vld [vmem:[#allocation3 + $0xb8] sm:$0xff]
    %v952 = vld [vmem:[#allocation3 + $0xc0] sm:$0xff]
    %v953 = vld [vmem:[#allocation3 + $0xc8] sm:$0xff]
    %v954 = vld [vmem:[#allocation3 + $0xd0] sm:$0xff]
    %v955 = vld [vmem:[#allocation3 + $0xd8] sm:$0xff]
    %v956 = vld [vmem:[#allocation3 + $0xe0] sm:$0xff]
    %v957 = vld [vmem:[#allocation3 + $0xe8] sm:$0xff]
    %v958 = vld [vmem:[#allocation3 + $0xf0] sm:$0xff]
    %v959 = vld [vmem:[#allocation3 + $0xf8] sm:$0xff]
    %v992 = vunpack.c.l.b16 %v928
    %v993 = vunpack.c.h.b16 %v928
    %v994 = vunpack.c.l.b16 %v929
    %v995 = vunpack.c.h.b16 %v929
    %v996 = vunpack.c.l.b16 %v930
    %v997 = vunpack.c.h.b16 %v930
    %v998 = vunpack.c.l.b16 %v931
    %v999 = vunpack.c.h.b16 %v931
    %v1000 = vunpack.c.l.b16 %v932
    %v1001 = vunpack.c.h.b16 %v932
    %v1002 = vunpack.c.l.b16 %v933
    %v1003 = vunpack.c.h.b16 %v933
    %v1004 = vunpack.c.l.b16 %v934
    %v1005 = vunpack.c.h.b16 %v934
    %v1006 = vunpack.c.l.b16 %v935
    %v1007 = vunpack.c.h.b16 %v935
    %v1008 = vunpack.c.l.b16 %v936
    %v1009 = vunpack.c.h.b16 %v936
    %v1010 = vunpack.c.l.b16 %v937
    %v1011 = vunpack.c.h.b16 %v937
    %v1012 = vunpack.c.l.b16 %v938
    %v1013 = vunpack.c.h.b16 %v938
    %v1014 = vunpack.c.l.b16 %v939
    %v1015 = vunpack.c.h.b16 %v939
    %v1016 = vunpack.c.l.b16 %v940
    %v1017 = vunpack.c.h.b16 %v940
    %v1018 = vunpack.c.l.b16 %v941
    %v1019 = vunpack.c.h.b16 %v941
    %v1020 = vunpack.c.l.b16 %v942
    %v1021 = vunpack.c.h.b16 %v942
    %v1022 = vunpack.c.l.b16 %v943
    %v1023 = vunpack.c.h.b16 %v943
    %v1024 = vunpack.c.l.b16 %v944
    %v1025 = vunpack.c.h.b16 %v944
    %v1026 = vunpack.c.l.b16 %v945
    %v1027 = vunpack.c.h.b16 %v945
    %v1028 = vunpack.c.l.b16 %v946
    %v1029 = vunpack.c.h.b16 %v946
    %v1030 = vunpack.c.l.b16 %v947
    %v1031 = vunpack.c.h.b16 %v947
    %v1032 = vunpack.c.l.b16 %v948
    %v1033 = vunpack.c.h.b16 %v948
    %v1034 = vunpack.c.l.b16 %v949
    %v1035 = vunpack.c.h.b16 %v949
    %v1036 = vunpack.c.l.b16 %v950
    %v1037 = vunpack.c.h.b16 %v950
    %v1038 = vunpack.c.l.b16 %v951
    %v1039 = vunpack.c.h.b16 %v951
    %v1040 = vunpack.c.l.b16 %v952
    %v1041 = vunpack.c.h.b16 %v952
    %v1042 = vunpack.c.l.b16 %v953
    %v1043 = vunpack.c.h.b16 %v953
    %v1044 = vunpack.c.l.b16 %v954
    %v1045 = vunpack.c.h.b16 %v954
    %v1046 = vunpack.c.l.b16 %v955
    %v1047 = vunpack.c.h.b16 %v955
    %v1048 = vunpack.c.l.b16 %v956
    %v1049 = vunpack.c.h.b16 %v956
    %v1050 = vunpack.c.l.b16 %v957
    %v1051 = vunpack.c.h.b16 %v957
    %v1052 = vunpack.c.l.b16 %v958
    %v1053 = vunpack.c.h.b16 %v958
    %v1054 = vunpack.c.l.b16 %v959
    %v1055 = vunpack.c.h.b16 %v959
    %v1056 = vpack.c.b16 %v996, %v992
    %v1057 = vpack.c.b16 %v997, %v993
    %v1058 = vpack.c.b16 %v998, %v994
    %v1059 = vpack.c.b16 %v999, %v995
    %v1060 = vpack.c.b16 %v1004, %v1000
    %v1061 = vpack.c.b16 %v1005, %v1001
    %v1062 = vpack.c.b16 %v1006, %v1002
    %v1063 = vpack.c.b16 %v1007, %v1003
    %v1064 = vpack.c.b16 %v1012, %v1008
    %v1065 = vpack.c.b16 %v1013, %v1009
    %v1066 = vpack.c.b16 %v1014, %v1010
    %v1067 = vpack.c.b16 %v1015, %v1011
    %v1068 = vpack.c.b16 %v1020, %v1016
    %v1069 = vpack.c.b16 %v1021, %v1017
    %v1070 = vpack.c.b16 %v1022, %v1018
    %v1071 = vpack.c.b16 %v1023, %v1019
    %v1072 = vpack.c.b16 %v1028, %v1024
    %v1073 = vpack.c.b16 %v1029, %v1025
    %v1074 = vpack.c.b16 %v1030, %v1026
    %v1075 = vpack.c.b16 %v1031, %v1027
    %v1076 = vpack.c.b16 %v1036, %v1032
    %v1077 = vpack.c.b16 %v1037, %v1033
    %v1078 = vpack.c.b16 %v1038, %v1034
    %v1079 = vpack.c.b16 %v1039, %v1035
    %v1080 = vpack.c.b16 %v1044, %v1040
    %v1081 = vpack.c.b16 %v1045, %v1041
    %v1082 = vpack.c.b16 %v1046, %v1042
    %v1083 = vpack.c.b16 %v1047, %v1043
    %v1084 = vpack.c.b16 %v1052, %v1048
    %v1085 = vpack.c.b16 %v1053, %v1049
    %v1086 = vpack.c.b16 %v1054, %v1050
    %v1087 = vpack.c.b16 %v1055, %v1051
    %1120 = vmatprep.subr.bf16.mxu0 %v1057
    %1121 = vmatpush1.bf16.msra.mxu0 %v1056
    %1122 = vmatprep.subr.bf16.mxu0 %v1061
    %1123 = vmatpush1.bf16.msra.mxu0 %v1060
    %1124 = vmatprep.subr.bf16.mxu0 %v1065
    %1125 = vmatpush1.bf16.msra.mxu0 %v1064
    %1126 = vmatprep.subr.bf16.mxu0 %v1069
    %1127 = vmatpush1.bf16.msra.mxu0 %v1068
    %1128 = vmatprep.subr.bf16.mxu0 %v1073
    %1129 = vmatpush1.bf16.msra.mxu0 %v1072
    %1130 = vmatprep.subr.bf16.mxu0 %v1077
    %1131 = vmatpush1.bf16.msra.mxu0 %v1076
    %1132 = vmatprep.subr.bf16.mxu0 %v1081
    %1133 = vmatpush1.bf16.msra.mxu0 %v1080
    %1134 = vmatprep.subr.bf16.mxu0 %v1085
    %1135 = vmatpush1.bf16.msra.mxu0 %v1084
    %1136 = vmatprep.subr.bf16.mxu0 0
    %1137 = vmatpush1.bf16.msra.mxu0 0
    %1138 = vmatprep.subr.bf16.mxu0 0
    %1139 = vmatpush1.bf16.msra.mxu0 0
    %1140 = vmatprep.subr.bf16.mxu0 0
    %1141 = vmatpush1.bf16.msra.mxu0 0
    %1142 = vmatprep.subr.bf16.mxu0 0
    %1143 = vmatpush1.bf16.msra.mxu0 0
    %1144 = vmatprep.subr.bf16.mxu0 0
    %1145 = vmatpush1.bf16.msra.mxu0 0
    %1146 = vmatprep.subr.bf16.mxu0 0
    %1147 = vmatpush1.bf16.msra.mxu0 0
    %1148 = vmatprep.subr.bf16.mxu0 0
    %1149 = vmatpush1.bf16.msra.mxu0 0
    %1150 = vmatprep.subr.bf16.mxu0 0
    %1151 = vmatpush1.bf16.msra.mxu0 0
    %1152 = vmatprep.mubr.bf16.mxu0 0
    %1153 = vmatmul.mubr.bf16.gmra.mrb[0].mxu0 %v927
    %v1154 = vpop.f32.mrb[0].mxu0
    %v1155 = vadd.f32 0.0, %v1154
    %v1156 = vpop.f32.mrb[0].mxu0
    %v1157 = vadd.f32 0.0, %v1156
    %v1158 = vpop.f32.mrb[0].mxu0
    %v1159 = vpop.f32.mrb[0].mxu0
    %1160 = vdwg.mxu0
    %1161 = vmatprep.subr.bf16.mxu0 %v1059
    %1162 = vmatpush1.bf16.msra.mxu0 %v1058
    %1163 = vmatprep.subr.bf16.mxu0 %v1063
    %1164 = vmatpush1.bf16.msra.mxu0 %v1062
    %1165 = vmatprep.subr.bf16.mxu0 %v1067
    %1166 = vmatpush1.bf16.msra.mxu0 %v1066
    %1167 = vmatprep.subr.bf16.mxu0 %v1071
    %1168 = vmatpush1.bf16.msra.mxu0 %v1070
    %1169 = vmatprep.subr.bf16.mxu0 %v1075
    %1170 = vmatpush1.bf16.msra.mxu0 %v1074
    %1171 = vmatprep.subr.bf16.mxu0 %v1079
    %1172 = vmatpush1.bf16.msra.mxu0 %v1078
    %1173 = vmatprep.subr.bf16.mxu0 %v1083
    %1174 = vmatpush1.bf16.msra.mxu0 %v1082
    %1175 = vmatprep.subr.bf16.mxu0 %v1087
    %1176 = vmatpush1.bf16.msra.mxu0 %v1086
    %1177 = vmatprep.subr.bf16.mxu0 0
    %1178 = vmatpush1.bf16.msra.mxu0 0
    %1179 = vmatprep.subr.bf16.mxu0 0
    %1180 = vmatpush1.bf16.msra.mxu0 0
    %1181 = vmatprep.subr.bf16.mxu0 0
    %1182 = vmatpush1.bf16.msra.mxu0 0
    %1183 = vmatprep.subr.bf16.mxu0 0
    %1184 = vmatpush1.bf16.msra.mxu0 0
    %1185 = vmatprep.subr.bf16.mxu0 0
    %1186 = vmatpush1.bf16.msra.mxu0 0
    %1187 = vmatprep.subr.bf16.mxu0 0
    %1188 = vmatpush1.bf16.msra.mxu0 0
    %1189 = vmatprep.subr.bf16.mxu0 0
    %1190 = vmatpush1.bf16.msra.mxu0 0
    %1191 = vmatprep.subr.bf16.mxu0 0
    %1192 = vmatpush1.bf16.msra.mxu0 0
    %1193 = vmatprep.mubr.bf16.mxu0 0
    %1194 = vmatmul.mubr.bf16.gmra.mrb[0].mxu0 %v927
    %v1195 = vpop.f32.mrb[0].mxu0
    %v1196 = vadd.f32 0.0, %v1195
    %v1197 = vpop.f32.mrb[0].mxu0
    %v1198 = vadd.f32 0.0, %v1197
    %v1199 = vpop.f32.mrb[0].mxu0
    %v1200 = vpop.f32.mrb[0].mxu0
    %1201 = vdwg.mxu0
    %s1202 = smul.u32 3, 2
    %s1203 = smul.addr %s1202, 8
    %s1204 = scalar_lea.vmem [#allocation2], %s1203
    %v1205 = vld [vmem:[%s1204] sm:$0xff]
    %v1206 = vld [vmem:[%s1204 + $0x8] sm:$0xff]
    %v1207 = vadd.f32 %v1155, %v1205
    %v1208 = vadd.f32 %v1157, %v1206
    %v1209 = vtanh.pop %v1207
    %v1210 = vtanh.pop %v1208
    %v1211 = vmul.f32 %v1209, 0.5
    %v1212 = vmul.f32 %v1210, 0.5
    %v1213 = vadd.f32 %v1211, 0.5
    %v1214 = vadd.f32 %v1212, 0.5
    %v1215 = vmul.f32 %v1213, %v888
    %1217 = vrot.lane.b32.xlu0 %v1210, 64
    %v1218 = vpop.permute.xlu0 %1217
    %v1220 = vmul.f32 %v1213, %v1218
    %1222 = vrot.lane.b32.xlu0 %v1220, 64
    %v1223 = vpop.permute.xlu0 %1222
    %v1225 = vadd.f32 %v1215, %v1223
    %v1226 = vtanh.pop %v1225
    %1228 = vrot.lane.b32.xlu0 %v1226, 64
    %v1229 = vpop.permute.xlu0 %1228
    %v1231 = vmul.f32 %v1214, %v1229
    %v1232 = vadd.f32 %v1196, %v225
    %v1233 = vadd.f32 %v1198, %v226
    %v1234 = vtanh.pop %v1232
    %v1235 = vtanh.pop %v1233
    %v1236 = vmul.f32 %v1234, 0.5
    %v1237 = vmul.f32 %v1235, 0.5
    %v1238 = vadd.f32 %v1236, 0.5
    %v1239 = vadd.f32 %v1237, 0.5
    %v1240 = vmul.f32 %v1238, %v913
    %1242 = vrot.lane.b32.xlu0 %v1235, 64
    %v1243 = vpop.permute.xlu0 %1242
    %v1245 = vmul.f32 %v1238, %v1243
    %1247 = vrot.lane.b32.xlu0 %v1245, 64
    %v1248 = vpop.permute.xlu0 %1247
    %v1250 = vadd.f32 %v1240, %v1248
    %v1251 = vtanh.pop %v1250
    %1253 = vrot.lane.b32.xlu0 %v1251, 64
    %v1254 = vpop.permute.xlu0 %1253
    %v1256 = vmul.f32 %v1239, %v1254
    %1258 = vrot.lane.b32.xlu0 %v1256, 64
    %v1259 = vpop.permute.xlu0 %1258
    %v1261 = vsel %vm252, %v1231, %v1259
    %s1262 = scalar_lea.vmem [#allocation6], 16
    %1263 = vst [vmem:[%s1262] sm:$0xff] %v1261
    %v1264 = vpack.c.bf16 %v1261, %v1261
    %v1265 = vld [vmem:[#allocation3] sm:$0xff]
    %v1266 = vld [vmem:[#allocation3 + $0x8] sm:$0xff]
    %v1267 = vld [vmem:[#allocation3 + $0x10] sm:$0xff]
    %v1268 = vld [vmem:[#allocation3 + $0x18] sm:$0xff]
    %v1269 = vld [vmem:[#allocation3 + $0x20] sm:$0xff]
    %v1270 = vld [vmem:[#allocation3 + $0x28] sm:$0xff]
    %v1271 = vld [vmem:[#allocation3 + $0x30] sm:$0xff]
    %v1272 = vld [vmem:[#allocation3 + $0x38] sm:$0xff]
    %v1273 = vld [vmem:[#allocation3 + $0x40] sm:$0xff]
    %v1274 = vld [vmem:[#allocation3 + $0x48] sm:$0xff]
    %v1275 = vld [vmem:[#allocation3 + $0x50] sm:$0xff]
    %v1276 = vld [vmem:[#allocation3 + $0x58] sm:$0xff]
    %v1277 = vld [vmem:[#allocation3 + $0x60] sm:$0xff]
    %v1278 = vld [vmem:[#allocation3 + $0x68] sm:$0xff]
    %v1279 = vld [vmem:[#allocation3 + $0x70] sm:$0xff]
    %v1280 = vld [vmem:[#allocation3 + $0x78] sm:$0xff]
    %v1281 = vld [vmem:[#allocation3 + $0x80] sm:$0xff]
    %v1282 = vld [vmem:[#allocation3 + $0x88] sm:$0xff]
    %v1283 = vld [vmem:[#allocation3 + $0x90] sm:$0xff]
    %v1284 = vld [vmem:[#allocation3 + $0x98] sm:$0xff]
    %v1285 = vld [vmem:[#allocation3 + $0xa0] sm:$0xff]
    %v1286 = vld [vmem:[#allocation3 + $0xa8] sm:$0xff]
    %v1287 = vld [vmem:[#allocation3 + $0xb0] sm:$0xff]
    %v1288 = vld [vmem:[#allocation3 + $0xb8] sm:$0xff]
    %v1289 = vld [vmem:[#allocation3 + $0xc0] sm:$0xff]
    %v1290 = vld [vmem:[#allocation3 + $0xc8] sm:$0xff]
    %v1291 = vld [vmem:[#allocation3 + $0xd0] sm:$0xff]
    %v1292 = vld [vmem:[#allocation3 + $0xd8] sm:$0xff]
    %v1293 = vld [vmem:[#allocation3 + $0xe0] sm:$0xff]
    %v1294 = vld [vmem:[#allocation3 + $0xe8] sm:$0xff]
    %v1295 = vld [vmem:[#allocation3 + $0xf0] sm:$0xff]
    %v1296 = vld [vmem:[#allocation3 + $0xf8] sm:$0xff]
    %v1329 = vunpack.c.l.b16 %v1265
    %v1330 = vunpack.c.h.b16 %v1265
    %v1331 = vunpack.c.l.b16 %v1266
    %v1332 = vunpack.c.h.b16 %v1266
    %v1333 = vunpack.c.l.b16 %v1267
    %v1334 = vunpack.c.h.b16 %v1267
    %v1335 = vunpack.c.l.b16 %v1268
    %v1336 = vunpack.c.h.b16 %v1268
    %v1337 = vunpack.c.l.b16 %v1269
    %v1338 = vunpack.c.h.b16 %v1269
    %v1339 = vunpack.c.l.b16 %v1270
    %v1340 = vunpack.c.h.b16 %v1270
    %v1341 = vunpack.c.l.b16 %v1271
    %v1342 = vunpack.c.h.b16 %v1271
    %v1343 = vunpack.c.l.b16 %v1272
    %v1344 = vunpack.c.h.b16 %v1272
    %v1345 = vunpack.c.l.b16 %v1273
    %v1346 = vunpack.c.h.b16 %v1273
    %v1347 = vunpack.c.l.b16 %v1274
    %v1348 = vunpack.c.h.b16 %v1274
    %v1349 = vunpack.c.l.b16 %v1275
    %v1350 = vunpack.c.h.b16 %v1275
    %v1351 = vunpack.c.l.b16 %v1276
    %v1352 = vunpack.c.h.b16 %v1276
    %v1353 = vunpack.c.l.b16 %v1277
    %v1354 = vunpack.c.h.b16 %v1277
    %v1355 = vunpack.c.l.b16 %v1278
    %v1356 = vunpack.c.h.b16 %v1278
    %v1357 = vunpack.c.l.b16 %v1279
    %v1358 = vunpack.c.h.b16 %v1279
    %v1359 = vunpack.c.l.b16 %v1280
    %v1360 = vunpack.c.h.b16 %v1280
    %v1361 = vunpack.c.l.b16 %v1281
    %v1362 = vunpack.c.h.b16 %v1281
    %v1363 = vunpack.c.l.b16 %v1282
    %v1364 = vunpack.c.h.b16 %v1282
    %v1365 = vunpack.c.l.b16 %v1283
    %v1366 = vunpack.c.h.b16 %v1283
    %v1367 = vunpack.c.l.b16 %v1284
    %v1368 = vunpack.c.h.b16 %v1284
    %v1369 = vunpack.c.l.b16 %v1285
    %v1370 = vunpack.c.h.b16 %v1285
    %v1371 = vunpack.c.l.b16 %v1286
    %v1372 = vunpack.c.h.b16 %v1286
    %v1373 = vunpack.c.l.b16 %v1287
    %v1374 = vunpack.c.h.b16 %v1287
    %v1375 = vunpack.c.l.b16 %v1288
    %v1376 = vunpack.c.h.b16 %v1288
    %v1377 = vunpack.c.l.b16 %v1289
    %v1378 = vunpack.c.h.b16 %v1289
    %v1379 = vunpack.c.l.b16 %v1290
    %v1380 = vunpack.c.h.b16 %v1290
    %v1381 = vunpack.c.l.b16 %v1291
    %v1382 = vunpack.c.h.b16 %v1291
    %v1383 = vunpack.c.l.b16 %v1292
    %v1384 = vunpack.c.h.b16 %v1292
    %v1385 = vunpack.c.l.b16 %v1293
    %v1386 = vunpack.c.h.b16 %v1293
    %v1387 = vunpack.c.l.b16 %v1294
    %v1388 = vunpack.c.h.b16 %v1294
    %v1389 = vunpack.c.l.b16 %v1295
    %v1390 = vunpack.c.h.b16 %v1295
    %v1391 = vunpack.c.l.b16 %v1296
    %v1392 = vunpack.c.h.b16 %v1296
    %v1393 = vpack.c.b16 %v1333, %v1329
    %v1394 = vpack.c.b16 %v1334, %v1330
    %v1395 = vpack.c.b16 %v1335, %v1331
    %v1396 = vpack.c.b16 %v1336, %v1332
    %v1397 = vpack.c.b16 %v1341, %v1337
    %v1398 = vpack.c.b16 %v1342, %v1338
    %v1399 = vpack.c.b16 %v1343, %v1339
    %v1400 = vpack.c.b16 %v1344, %v1340
    %v1401 = vpack.c.b16 %v1349, %v1345
    %v1402 = vpack.c.b16 %v1350, %v1346
    %v1403 = vpack.c.b16 %v1351, %v1347
    %v1404 = vpack.c.b16 %v1352, %v1348
    %v1405 = vpack.c.b16 %v1357, %v1353
    %v1406 = vpack.c.b16 %v1358, %v1354
    %v1407 = vpack.c.b16 %v1359, %v1355
    %v1408 = vpack.c.b16 %v1360, %v1356
    %v1409 = vpack.c.b16 %v1365, %v1361
    %v1410 = vpack.c.b16 %v1366, %v1362
    %v1411 = vpack.c.b16 %v1367, %v1363
    %v1412 = vpack.c.b16 %v1368, %v1364
    %v1413 = vpack.c.b16 %v1373, %v1369
    %v1414 = vpack.c.b16 %v1374, %v1370
    %v1415 = vpack.c.b16 %v1375, %v1371
    %v1416 = vpack.c.b16 %v1376, %v1372
    %v1417 = vpack.c.b16 %v1381, %v1377
    %v1418 = vpack.c.b16 %v1382, %v1378
    %v1419 = vpack.c.b16 %v1383, %v1379
    %v1420 = vpack.c.b16 %v1384, %v1380
    %v1421 = vpack.c.b16 %v1389, %v1385
    %v1422 = vpack.c.b16 %v1390, %v1386
    %v1423 = vpack.c.b16 %v1391, %v1387
    %v1424 = vpack.c.b16 %v1392, %v1388
    %1457 = vmatprep.subr.bf16.mxu0 %v1394
    %1458 = vmatpush1.bf16.msra.mxu0 %v1393
    %1459 = vmatprep.subr.bf16.mxu0 %v1398
    %1460 = vmatpush1.bf16.msra.mxu0 %v1397
    %1461 = vmatprep.subr.bf16.mxu0 %v1402
    %1462 = vmatpush1.bf16.msra.mxu0 %v1401
    %1463 = vmatprep.subr.bf16.mxu0 %v1406
    %1464 = vmatpush1.bf16.msra.mxu0 %v1405
    %1465 = vmatprep.subr.bf16.mxu0 %v1410
    %1466 = vmatpush1.bf16.msra.mxu0 %v1409
    %1467 = vmatprep.subr.bf16.mxu0 %v1414
    %1468 = vmatpush1.bf16.msra.mxu0 %v1413
    %1469 = vmatprep.subr.bf16.mxu0 %v1418
    %1470 = vmatpush1.bf16.msra.mxu0 %v1417
    %1471 = vmatprep.subr.bf16.mxu0 %v1422
    %1472 = vmatpush1.bf16.msra.mxu0 %v1421
    %1473 = vmatprep.subr.bf16.mxu0 0
    %1474 = vmatpush1.bf16.msra.mxu0 0
    %1475 = vmatprep.subr.bf16.mxu0 0
    %1476 = vmatpush1.bf16.msra.mxu0 0
    %1477 = vmatprep.subr.bf16.mxu0 0
    %1478 = vmatpush1.bf16.msra.mxu0 0
    %1479 = vmatprep.subr.bf16.mxu0 0
    %1480 = vmatpush1.bf16.msra.mxu0 0
    %1481 = vmatprep.subr.bf16.mxu0 0
    %1482 = vmatpush1.bf16.msra.mxu0 0
    %1483 = vmatprep.subr.bf16.mxu0 0
    %1484 = vmatpush1.bf16.msra.mxu0 0
    %1485 = vmatprep.subr.bf16.mxu0 0
    %1486 = vmatpush1.bf16.msra.mxu0 0
    %1487 = vmatprep.subr.bf16.mxu0 0
    %1488 = vmatpush1.bf16.msra.mxu0 0
    %1489 = vmatprep.mubr.bf16.mxu0 0
    %1490 = vmatmul.mubr.bf16.gmra.mrb[0].mxu0 %v1264
    %v1491 = vpop.f32.mrb[0].mxu0
    %v1492 = vadd.f32 0.0, %v1491
    %v1493 = vpop.f32.mrb[0].mxu0
    %v1494 = vadd.f32 0.0, %v1493
    %v1495 = vpop.f32.mrb[0].mxu0
    %v1496 = vpop.f32.mrb[0].mxu0
    %1497 = vdwg.mxu0
    %1498 = vmatprep.subr.bf16.mxu0 %v1396
    %1499 = vmatpush1.bf16.msra.mxu0 %v1395
    %1500 = vmatprep.subr.bf16.mxu0 %v1400
    %1501 = vmatpush1.bf16.msra.mxu0 %v1399
    %1502 = vmatprep.subr.bf16.mxu0 %v1404
    %1503 = vmatpush1.bf16.msra.mxu0 %v1403
    %1504 = vmatprep.subr.bf16.mxu0 %v1408
    %1505 = vmatpush1.bf16.msra.mxu0 %v1407
    %1506 = vmatprep.subr.bf16.mxu0 %v1412
    %1507 = vmatpush1.bf16.msra.mxu0 %v1411
    %1508 = vmatprep.subr.bf16.mxu0 %v1416
    %1509 = vmatpush1.bf16.msra.mxu0 %v1415
    %1510 = vmatprep.subr.bf16.mxu0 %v1420
    %1511 = vmatpush1.bf16.msra.mxu0 %v1419
    %1512 = vmatprep.subr.bf16.mxu0 %v1424
    %1513 = vmatpush1.bf16.msra.mxu0 %v1423
    %1514 = vmatprep.subr.bf16.mxu0 0
    %1515 = vmatpush1.bf16.msra.mxu0 0
    %1516 = vmatprep.subr.bf16.mxu0 0
    %1517 = vmatpush1.bf16.msra.mxu0 0
    %1518 = vmatprep.subr.bf16.mxu0 0
    %1519 = vmatpush1.bf16.msra.mxu0 0
    %1520 = vmatprep.subr.bf16.mxu0 0
    %1521 = vmatpush1.bf16.msra.mxu0 0
    %1522 = vmatprep.subr.bf16.mxu0 0
    %1523 = vmatpush1.bf16.msra.mxu0 0
    %1524 = vmatprep.subr.bf16.mxu0 0
    %1525 = vmatpush1.bf16.msra.mxu0 0
    %1526 = vmatprep.subr.bf16.mxu0 0
    %1527 = vmatpush1.bf16.msra.mxu0 0
    %1528 = vmatprep.subr.bf16.mxu0 0
    %1529 = vmatpush1.bf16.msra.mxu0 0
    %1530 = vmatprep.mubr.bf16.mxu0 0
    %1531 = vmatmul.mubr.bf16.gmra.mrb[0].mxu0 %v1264
    %v1532 = vpop.f32.mrb[0].mxu0
    %v1533 = vadd.f32 0.0, %v1532
    %v1534 = vpop.f32.mrb[0].mxu0
    %v1535 = vadd.f32 0.0, %v1534
    %v1536 = vpop.f32.mrb[0].mxu0
    %v1537 = vpop.f32.mrb[0].mxu0
    %1538 = vdwg.mxu0
    %s1539 = smul.u32 4, 2
    %s1540 = smul.addr %s1539, 8
    %s1541 = scalar_lea.vmem [#allocation2], %s1540
    %v1542 = vld [vmem:[%s1541] sm:$0xff]
    %v1543 = vld [vmem:[%s1541 + $0x8] sm:$0xff]
    %v1544 = vadd.f32 %v1492, %v1542
    %v1545 = vadd.f32 %v1494, %v1543
    %v1546 = vtanh.pop %v1544
    %v1547 = vtanh.pop %v1545
    %v1548 = vmul.f32 %v1546, 0.5
    %v1549 = vmul.f32 %v1547, 0.5
    %v1550 = vadd.f32 %v1548, 0.5
    %v1551 = vadd.f32 %v1549, 0.5
    %v1552 = vmul.f32 %v1550, %v1225
    %1554 = vrot.lane.b32.xlu0 %v1547, 64
    %v1555 = vpop.permute.xlu0 %1554
    %v1557 = vmul.f32 %v1550, %v1555
    %1559 = vrot.lane.b32.xlu0 %v1557, 64
    %v1560 = vpop.permute.xlu0 %1559
    %v1562 = vadd.f32 %v1552, %v1560
    %v1563 = vtanh.pop %v1562
    %1565 = vrot.lane.b32.xlu0 %v1563, 64
    %v1566 = vpop.permute.xlu0 %1565
    %v1568 = vmul.f32 %v1551, %v1566
    %v1569 = vadd.f32 %v1533, %v225
    %v1570 = vadd.f32 %v1535, %v226
    %v1571 = vtanh.pop %v1569
    %v1572 = vtanh.pop %v1570
    %v1573 = vmul.f32 %v1571, 0.5
    %v1574 = vmul.f32 %v1572, 0.5
    %v1575 = vadd.f32 %v1573, 0.5
    %v1576 = vadd.f32 %v1574, 0.5
    %v1577 = vmul.f32 %v1575, %v1250
    %1579 = vrot.lane.b32.xlu0 %v1572, 64
    %v1580 = vpop.permute.xlu0 %1579
    %v1582 = vmul.f32 %v1575, %v1580
    %1584 = vrot.lane.b32.xlu0 %v1582, 64
    %v1585 = vpop.permute.xlu0 %1584
    %v1587 = vadd.f32 %v1577, %v1585
    %v1588 = vtanh.pop %v1587
    %1590 = vrot.lane.b32.xlu0 %v1588, 64
    %v1591 = vpop.permute.xlu0 %1590
    %v1593 = vmul.f32 %v1576, %v1591
    %1595 = vrot.lane.b32.xlu0 %v1593, 64
    %v1596 = vpop.permute.xlu0 %1595
    %v1598 = vsel %vm252, %v1568, %v1596
    %s1599 = scalar_lea.vmem [#allocation6], 24
    %1600 = vst [vmem:[%s1599] sm:$0xff] %v1598
    %v1601 = vpack.c.bf16 %v1598, %v1598
    %v1602 = vld [vmem:[#allocation3] sm:$0xff]
    %v1603 = vld [vmem:[#allocation3 + $0x8] sm:$0xff]
    %v1604 = vld [vmem:[#allocation3 + $0x10] sm:$0xff]
    %v1605 = vld [vmem:[#allocation3 + $0x18] sm:$0xff]
    %v1606 = vld [vmem:[#allocation3 + $0x20] sm:$0xff]
    %v1607 = vld [vmem:[#allocation3 + $0x28] sm:$0xff]
    %v1608 = vld [vmem:[#allocation3 + $0x30] sm:$0xff]
    %v1609 = vld [vmem:[#allocation3 + $0x38] sm:$0xff]
    %v1610 = vld [vmem:[#allocation3 + $0x40] sm:$0xff]
    %v1611 = vld [vmem:[#allocation3 + $0x48] sm:$0xff]
    %v1612 = vld [vmem:[#allocation3 + $0x50] sm:$0xff]
    %v1613 = vld [vmem:[#allocation3 + $0x58] sm:$0xff]
    %v1614 = vld [vmem:[#allocation3 + $0x60] sm:$0xff]
    %v1615 = vld [vmem:[#allocation3 + $0x68] sm:$0xff]
    %v1616 = vld [vmem:[#allocation3 + $0x70] sm:$0xff]
    %v1617 = vld [vmem:[#allocation3 + $0x78] sm:$0xff]
    %v1618 = vld [vmem:[#allocation3 + $0x80] sm:$0xff]
    %v1619 = vld [vmem:[#allocation3 + $0x88] sm:$0xff]
    %v1620 = vld [vmem:[#allocation3 + $0x90] sm:$0xff]
    %v1621 = vld [vmem:[#allocation3 + $0x98] sm:$0xff]
    %v1622 = vld [vmem:[#allocation3 + $0xa0] sm:$0xff]
    %v1623 = vld [vmem:[#allocation3 + $0xa8] sm:$0xff]
    %v1624 = vld [vmem:[#allocation3 + $0xb0] sm:$0xff]
    %v1625 = vld [vmem:[#allocation3 + $0xb8] sm:$0xff]
    %v1626 = vld [vmem:[#allocation3 + $0xc0] sm:$0xff]
    %v1627 = vld [vmem:[#allocation3 + $0xc8] sm:$0xff]
    %v1628 = vld [vmem:[#allocation3 + $0xd0] sm:$0xff]
    %v1629 = vld [vmem:[#allocation3 + $0xd8] sm:$0xff]
    %v1630 = vld [vmem:[#allocation3 + $0xe0] sm:$0xff]
    %v1631 = vld [vmem:[#allocation3 + $0xe8] sm:$0xff]
    %v1632 = vld [vmem:[#allocation3 + $0xf0] sm:$0xff]
    %v1633 = vld [vmem:[#allocation3 + $0xf8] sm:$0xff]
    %v1666 = vunpack.c.l.b16 %v1602
    %v1667 = vunpack.c.h.b16 %v1602
    %v1668 = vunpack.c.l.b16 %v1603
    %v1669 = vunpack.c.h.b16 %v1603
    %v1670 = vunpack.c.l.b16 %v1604
    %v1671 = vunpack.c.h.b16 %v1604
    %v1672 = vunpack.c.l.b16 %v1605
    %v1673 = vunpack.c.h.b16 %v1605
    %v1674 = vunpack.c.l.b16 %v1606
    %v1675 = vunpack.c.h.b16 %v1606
    %v1676 = vunpack.c.l.b16 %v1607
    %v1677 = vunpack.c.h.b16 %v1607
    %v1678 = vunpack.c.l.b16 %v1608
    %v1679 = vunpack.c.h.b16 %v1608
    %v1680 = vunpack.c.l.b16 %v1609
    %v1681 = vunpack.c.h.b16 %v1609
    %v1682 = vunpack.c.l.b16 %v1610
    %v1683 = vunpack.c.h.b16 %v1610
    %v1684 = vunpack.c.l.b16 %v1611
    %v1685 = vunpack.c.h.b16 %v1611
    %v1686 = vunpack.c.l.b16 %v1612
    %v1687 = vunpack.c.h.b16 %v1612
    %v1688 = vunpack.c.l.b16 %v1613
    %v1689 = vunpack.c.h.b16 %v1613
    %v1690 = vunpack.c.l.b16 %v1614
    %v1691 = vunpack.c.h.b16 %v1614
    %v1692 = vunpack.c.l.b16 %v1615
    %v1693 = vunpack.c.h.b16 %v1615
    %v1694 = vunpack.c.l.b16 %v1616
    %v1695 = vunpack.c.h.b16 %v1616
    %v1696 = vunpack.c.l.b16 %v1617
    %v1697 = vunpack.c.h.b16 %v1617
    %v1698 = vunpack.c.l.b16 %v1618
    %v1699 = vunpack.c.h.b16 %v1618
    %v1700 = vunpack.c.l.b16 %v1619
    %v1701 = vunpack.c.h.b16 %v1619
    %v1702 = vunpack.c.l.b16 %v1620
    %v1703 = vunpack.c.h.b16 %v1620
    %v1704 = vunpack.c.l.b16 %v1621
    %v1705 = vunpack.c.h.b16 %v1621
    %v1706 = vunpack.c.l.b16 %v1622
    %v1707 = vunpack.c.h.b16 %v1622
    %v1708 = vunpack.c.l.b16 %v1623
    %v1709 = vunpack.c.h.b16 %v1623
    %v1710 = vunpack.c.l.b16 %v1624
    %v1711 = vunpack.c.h.b16 %v1624
    %v1712 = vunpack.c.l.b16 %v1625
    %v1713 = vunpack.c.h.b16 %v1625
    %v1714 = vunpack.c.l.b16 %v1626
    %v1715 = vunpack.c.h.b16 %v1626
    %v1716 = vunpack.c.l.b16 %v1627
    %v1717 = vunpack.c.h.b16 %v1627
    %v1718 = vunpack.c.l.b16 %v1628
    %v1719 = vunpack.c.h.b16 %v1628
    %v1720 = vunpack.c.l.b16 %v1629
    %v1721 = vunpack.c.h.b16 %v1629
    %v1722 = vunpack.c.l.b16 %v1630
    %v1723 = vunpack.c.h.b16 %v1630
    %v1724 = vunpack.c.l.b16 %v1631
    %v1725 = vunpack.c.h.b16 %v1631
    %v1726 = vunpack.c.l.b16 %v1632
    %v1727 = vunpack.c.h.b16 %v1632
    %v1728 = vunpack.c.l.b16 %v1633
    %v1729 = vunpack.c.h.b16 %v1633
    %v1730 = vpack.c.b16 %v1670, %v1666
    %v1731 = vpack.c.b16 %v1671, %v1667
    %v1732 = vpack.c.b16 %v1672, %v1668
    %v1733 = vpack.c.b16 %v1673, %v1669
    %v1734 = vpack.c.b16 %v1678, %v1674
    %v1735 = vpack.c.b16 %v1679, %v1675
    %v1736 = vpack.c.b16 %v1680, %v1676
    %v1737 = vpack.c.b16 %v1681, %v1677
    %v1738 = vpack.c.b16 %v1686, %v1682
    %v1739 = vpack.c.b16 %v1687, %v1683
    %v1740 = vpack.c.b16 %v1688, %v1684
    %v1741 = vpack.c.b16 %v1689, %v1685
    %v1742 = vpack.c.b16 %v1694, %v1690
    %v1743 = vpack.c.b16 %v1695, %v1691
    %v1744 = vpack.c.b16 %v1696, %v1692
    %v1745 = vpack.c.b16 %v1697, %v1693
    %v1746 = vpack.c.b16 %v1702, %v1698
    %v1747 = vpack.c.b16 %v1703, %v1699
    %v1748 = vpack.c.b16 %v1704, %v1700
    %v1749 = vpack.c.b16 %v1705, %v1701
    %v1750 = vpack.c.b16 %v1710, %v1706
    %v1751 = vpack.c.b16 %v1711, %v1707
    %v1752 = vpack.c.b16 %v1712, %v1708
    %v1753 = vpack.c.b16 %v1713, %v1709
    %v1754 = vpack.c.b16 %v1718, %v1714
    %v1755 = vpack.c.b16 %v1719, %v1715
    %v1756 = vpack.c.b16 %v1720, %v1716
    %v1757 = vpack.c.b16 %v1721, %v1717
    %v1758 = vpack.c.b16 %v1726, %v1722
    %v1759 = vpack.c.b16 %v1727, %v1723
    %v1760 = vpack.c.b16 %v1728, %v1724
    %v1761 = vpack.c.b16 %v1729, %v1725
    %1794 = vmatprep.subr.bf16.mxu0 %v1731
    %1795 = vmatpush1.bf16.msra.mxu0 %v1730
    %1796 = vmatprep.subr.bf16.mxu0 %v1735
    %1797 = vmatpush1.bf16.msra.mxu0 %v1734
    %1798 = vmatprep.subr.bf16.mxu0 %v1739
    %1799 = vmatpush1.bf16.msra.mxu0 %v1738
    %1800 = vmatprep.subr.bf16.mxu0 %v1743
    %1801 = vmatpush1.bf16.msra.mxu0 %v1742
    %1802 = vmatprep.subr.bf16.mxu0 %v1747
    %1803 = vmatpush1.bf16.msra.mxu0 %v1746
    %1804 = vmatprep.subr.bf16.mxu0 %v1751
    %1805 = vmatpush1.bf16.msra.mxu0 %v1750
    %1806 = vmatprep.subr.bf16.mxu0 %v1755
    %1807 = vmatpush1.bf16.msra.mxu0 %v1754
    %1808 = vmatprep.subr.bf16.mxu0 %v1759
    %1809 = vmatpush1.bf16.msra.mxu0 %v1758
    %1810 = vmatprep.subr.bf16.mxu0 0
    %1811 = vmatpush1.bf16.msra.mxu0 0
    %1812 = vmatprep.subr.bf16.mxu0 0
    %1813 = vmatpush1.bf16.msra.mxu0 0
    %1814 = vmatprep.subr.bf16.mxu0 0
    %1815 = vmatpush1.bf16.msra.mxu0 0
    %1816 = vmatprep.subr.bf16.mxu0 0
    %1817 = vmatpush1.bf16.msra.mxu0 0
    %1818 = vmatprep.subr.bf16.mxu0 0
    %1819 = vmatpush1.bf16.msra.mxu0 0
    %1820 = vmatprep.subr.bf16.mxu0 0
    %1821 = vmatpush1.bf16.msra.mxu0 0
    %1822 = vmatprep.subr.bf16.mxu0 0
    %1823 = vmatpush1.bf16.msra.mxu0 0
    %1824 = vmatprep.subr.bf16.mxu0 0
    %1825 = vmatpush1.bf16.msra.mxu0 0
    %1826 = vmatprep.mubr.bf16.mxu0 0
    %1827 = vmatmul.mubr.bf16.gmra.mrb[0].mxu0 %v1601
    %v1828 = vpop.f32.mrb[0].mxu0
    %v1829 = vadd.f32 0.0, %v1828
    %v1830 = vpop.f32.mrb[0].mxu0
    %v1831 = vadd.f32 0.0, %v1830
    %v1832 = vpop.f32.mrb[0].mxu0
    %v1833 = vpop.f32.mrb[0].mxu0
    %1834 = vdwg.mxu0
    %1835 = vmatprep.subr.bf16.mxu0 %v1733
    %1836 = vmatpush1.bf16.msra.mxu0 %v1732
    %1837 = vmatprep.subr.bf16.mxu0 %v1737
    %1838 = vmatpush1.bf16.msra.mxu0 %v1736
    %1839 = vmatprep.subr.bf16.mxu0 %v1741
    %1840 = vmatpush1.bf16.msra.mxu0 %v1740
    %1841 = vmatprep.subr.bf16.mxu0 %v1745
    %1842 = vmatpush1.bf16.msra.mxu0 %v1744
    %1843 = vmatprep.subr.bf16.mxu0 %v1749
    %1844 = vmatpush1.bf16.msra.mxu0 %v1748
    %1845 = vmatprep.subr.bf16.mxu0 %v1753
    %1846 = vmatpush1.bf16.msra.mxu0 %v1752
    %1847 = vmatprep.subr.bf16.mxu0 %v1757
    %1848 = vmatpush1.bf16.msra.mxu0 %v1756
    %1849 = vmatprep.subr.bf16.mxu0 %v1761
    %1850 = vmatpush1.bf16.msra.mxu0 %v1760
    %1851 = vmatprep.subr.bf16.mxu0 0
    %1852 = vmatpush1.bf16.msra.mxu0 0
    %1853 = vmatprep.subr.bf16.mxu0 0
    %1854 = vmatpush1.bf16.msra.mxu0 0
    %1855 = vmatprep.subr.bf16.mxu0 0
    %1856 = vmatpush1.bf16.msra.mxu0 0
    %1857 = vmatprep.subr.bf16.mxu0 0
    %1858 = vmatpush1.bf16.msra.mxu0 0
    %1859 = vmatprep.subr.bf16.mxu0 0
    %1860 = vmatpush1.bf16.msra.mxu0 0
    %1861 = vmatprep.subr.bf16.mxu0 0
    %1862 = vmatpush1.bf16.msra.mxu0 0
    %1863 = vmatprep.subr.bf16.mxu0 0
    %1864 = vmatpush1.bf16.msra.mxu0 0
    %1865 = vmatprep.subr.bf16.mxu0 0
    %1866 = vmatpush1.bf16.msra.mxu0 0
    %1867 = vmatprep.mubr.bf16.mxu0 0
    %1868 = vmatmul.mubr.bf16.gmra.mrb[0].mxu0 %v1601
    %v1869 = vpop.f32.mrb[0].mxu0
    %v1870 = vadd.f32 0.0, %v1869
    %v1871 = vpop.f32.mrb[0].mxu0
    %v1872 = vadd.f32 0.0, %v1871
    %v1873 = vpop.f32.mrb[0].mxu0
    %v1874 = vpop.f32.mrb[0].mxu0
    %1875 = vdwg.mxu0
    %s1876 = smul.u32 5, 2
    %s1877 = smul.addr %s1876, 8
    %s1878 = scalar_lea.vmem [#allocation2], %s1877
    %v1879 = vld [vmem:[%s1878] sm:$0xff]
    %v1880 = vld [vmem:[%s1878 + $0x8] sm:$0xff]
    %v1881 = vadd.f32 %v1829, %v1879
    %v1882 = vadd.f32 %v1831, %v1880
    %v1883 = vtanh.pop %v1881
    %v1884 = vtanh.pop %v1882
    %v1885 = vmul.f32 %v1883, 0.5
    %v1886 = vmul.f32 %v1884, 0.5
    %v1887 = vadd.f32 %v1885, 0.5
    %v1888 = vadd.f32 %v1886, 0.5
    %v1889 = vmul.f32 %v1887, %v1562
    %1891 = vrot.lane.b32.xlu0 %v1884, 64
    %v1892 = vpop.permute.xlu0 %1891
    %v1894 = vmul.f32 %v1887, %v1892
    %1896 = vrot.lane.b32.xlu0 %v1894, 64
    %v1897 = vpop.permute.xlu0 %1896
    %v1899 = vadd.f32 %v1889, %v1897
    %v1900 = vtanh.pop %v1899
    %1902 = vrot.lane.b32.xlu0 %v1900, 64
    %v1903 = vpop.permute.xlu0 %1902
    %v1905 = vmul.f32 %v1888, %v1903
    %v1906 = vadd.f32 %v1870, %v225
    %v1907 = vadd.f32 %v1872, %v226
    %v1908 = vtanh.pop %v1906
    %v1909 = vtanh.pop %v1907
    %v1910 = vmul.f32 %v1908, 0.5
    %v1911 = vmul.f32 %v1909, 0.5
    %v1912 = vadd.f32 %v1910, 0.5
    %v1913 = vadd.f32 %v1911, 0.5
    %v1914 = vmul.f32 %v1912, %v1587
    %1916 = vrot.lane.b32.xlu0 %v1909, 64
    %v1917 = vpop.permute.xlu0 %1916
    %v1919 = vmul.f32 %v1912, %v1917
    %1921 = vrot.lane.b32.xlu0 %v1919, 64
    %v1922 = vpop.permute.xlu0 %1921
    %v1924 = vadd.f32 %v1914, %v1922
    %v1925 = vtanh.pop %v1924
    %1927 = vrot.lane.b32.xlu0 %v1925, 64
    %v1928 = vpop.permute.xlu0 %1927
    %v1930 = vmul.f32 %v1913, %v1928
    %1932 = vrot.lane.b32.xlu0 %v1930, 64
    %v1933 = vpop.permute.xlu0 %1932
    %v1935 = vsel %vm252, %v1905, %v1933
    %s1936 = scalar_lea.vmem [#allocation6], 32
    %1937 = vst [vmem:[%s1936] sm:$0xff] %v1935
    %v1938 = vpack.c.bf16 %v1935, %v1935
    %v1939 = vld [vmem:[#allocation3] sm:$0xff]
    %v1940 = vld [vmem:[#allocation3 + $0x8] sm:$0xff]
    %v1941 = vld [vmem:[#allocation3 + $0x10] sm:$0xff]
    %v1942 = vld [vmem:[#allocation3 + $0x18] sm:$0xff]
    %v1943 = vld [vmem:[#allocation3 + $0x20] sm:$0xff]
    %v1944 = vld [vmem:[#allocation3 + $0x28] sm:$0xff]
    %v1945 = vld [vmem:[#allocation3 + $0x30] sm:$0xff]
    %v1946 = vld [vmem:[#allocation3 + $0x38] sm:$0xff]
    %v1947 = vld [vmem:[#allocation3 + $0x40] sm:$0xff]
    %v1948 = vld [vmem:[#allocation3 + $0x48] sm:$0xff]
    %v1949 = vld [vmem:[#allocation3 + $0x50] sm:$0xff]
    %v1950 = vld [vmem:[#allocation3 + $0x58] sm:$0xff]
    %v1951 = vld [vmem:[#allocation3 + $0x60] sm:$0xff]
    %v1952 = vld [vmem:[#allocation3 + $0x68] sm:$0xff]
    %v1953 = vld [vmem:[#allocation3 + $0x70] sm:$0xff]
    %v1954 = vld [vmem:[#allocation3 + $0x78] sm:$0xff]
    %v1955 = vld [vmem:[#allocation3 + $0x80] sm:$0xff]
    %v1956 = vld [vmem:[#allocation3 + $0x88] sm:$0xff]
    %v1957 = vld [vmem:[#allocation3 + $0x90] sm:$0xff]
    %v1958 = vld [vmem:[#allocation3 + $0x98] sm:$0xff]
    %v1959 = vld [vmem:[#allocation3 + $0xa0] sm:$0xff]
    %v1960 = vld [vmem:[#allocation3 + $0xa8] sm:$0xff]
    %v1961 = vld [vmem:[#allocation3 + $0xb0] sm:$0xff]
    %v1962 = vld [vmem:[#allocation3 + $0xb8] sm:$0xff]
    %v1963 = vld [vmem:[#allocation3 + $0xc0] sm:$0xff]
    %v1964 = vld [vmem:[#allocation3 + $0xc8] sm:$0xff]
    %v1965 = vld [vmem:[#allocation3 + $0xd0] sm:$0xff]
    %v1966 = vld [vmem:[#allocation3 + $0xd8] sm:$0xff]
    %v1967 = vld [vmem:[#allocation3 + $0xe0] sm:$0xff]
    %v1968 = vld [vmem:[#allocation3 + $0xe8] sm:$0xff]
    %v1969 = vld [vmem:[#allocation3 + $0xf0] sm:$0xff]
    %v1970 = vld [vmem:[#allocation3 + $0xf8] sm:$0xff]
    %v2003 = vunpack.c.l.b16 %v1939
    %v2004 = vunpack.c.h.b16 %v1939
    %v2005 = vunpack.c.l.b16 %v1940
    %v2006 = vunpack.c.h.b16 %v1940
    %v2007 = vunpack.c.l.b16 %v1941
    %v2008 = vunpack.c.h.b16 %v1941
    %v2009 = vunpack.c.l.b16 %v1942
    %v2010 = vunpack.c.h.b16 %v1942
    %v2011 = vunpack.c.l.b16 %v1943
    %v2012 = vunpack.c.h.b16 %v1943
    %v2013 = vunpack.c.l.b16 %v1944
    %v2014 = vunpack.c.h.b16 %v1944
    %v2015 = vunpack.c.l.b16 %v1945
    %v2016 = vunpack.c.h.b16 %v1945
    %v2017 = vunpack.c.l.b16 %v1946
    %v2018 = vunpack.c.h.b16 %v1946
    %v2019 = vunpack.c.l.b16 %v1947
    %v2020 = vunpack.c.h.b16 %v1947
    %v2021 = vunpack.c.l.b16 %v1948
    %v2022 = vunpack.c.h.b16 %v1948
    %v2023 = vunpack.c.l.b16 %v1949
    %v2024 = vunpack.c.h.b16 %v1949
    %v2025 = vunpack.c.l.b16 %v1950
    %v2026 = vunpack.c.h.b16 %v1950
    %v2027 = vunpack.c.l.b16 %v1951
    %v2028 = vunpack.c.h.b16 %v1951
    %v2029 = vunpack.c.l.b16 %v1952
    %v2030 = vunpack.c.h.b16 %v1952
    %v2031 = vunpack.c.l.b16 %v1953
    %v2032 = vunpack.c.h.b16 %v1953
    %v2033 = vunpack.c.l.b16 %v1954
    %v2034 = vunpack.c.h.b16 %v1954
    %v2035 = vunpack.c.l.b16 %v1955
    %v2036 = vunpack.c.h.b16 %v1955
    %v2037 = vunpack.c.l.b16 %v1956
    %v2038 = vunpack.c.h.b16 %v1956
    %v2039 = vunpack.c.l.b16 %v1957
    %v2040 = vunpack.c.h.b16 %v1957
    %v2041 = vunpack.c.l.b16 %v1958
    %v2042 = vunpack.c.h.b16 %v1958
    %v2043 = vunpack.c.l.b16 %v1959
    %v2044 = vunpack.c.h.b16 %v1959
    %v2045 = vunpack.c.l.b16 %v1960
    %v2046 = vunpack.c.h.b16 %v1960
    %v2047 = vunpack.c.l.b16 %v1961
    %v2048 = vunpack.c.h.b16 %v1961
    %v2049 = vunpack.c.l.b16 %v1962
    %v2050 = vunpack.c.h.b16 %v1962
    %v2051 = vunpack.c.l.b16 %v1963
    %v2052 = vunpack.c.h.b16 %v1963
    %v2053 = vunpack.c.l.b16 %v1964
    %v2054 = vunpack.c.h.b16 %v1964
    %v2055 = vunpack.c.l.b16 %v1965
    %v2056 = vunpack.c.h.b16 %v1965
    %v2057 = vunpack.c.l.b16 %v1966
    %v2058 = vunpack.c.h.b16 %v1966
    %v2059 = vunpack.c.l.b16 %v1967
    %v2060 = vunpack.c.h.b16 %v1967
    %v2061 = vunpack.c.l.b16 %v1968
    %v2062 = vunpack.c.h.b16 %v1968
    %v2063 = vunpack.c.l.b16 %v1969
    %v2064 = vunpack.c.h.b16 %v1969
    %v2065 = vunpack.c.l.b16 %v1970
    %v2066 = vunpack.c.h.b16 %v1970
    %v2067 = vpack.c.b16 %v2007, %v2003
    %v2068 = vpack.c.b16 %v2008, %v2004
    %v2069 = vpack.c.b16 %v2009, %v2005
    %v2070 = vpack.c.b16 %v2010, %v2006
    %v2071 = vpack.c.b16 %v2015, %v2011
    %v2072 = vpack.c.b16 %v2016, %v2012
    %v2073 = vpack.c.b16 %v2017, %v2013
    %v2074 = vpack.c.b16 %v2018, %v2014
    %v2075 = vpack.c.b16 %v2023, %v2019
    %v2076 = vpack.c.b16 %v2024, %v2020
    %v2077 = vpack.c.b16 %v2025, %v2021
    %v2078 = vpack.c.b16 %v2026, %v2022
    %v2079 = vpack.c.b16 %v2031, %v2027
    %v2080 = vpack.c.b16 %v2032, %v2028
    %v2081 = vpack.c.b16 %v2033, %v2029
    %v2082 = vpack.c.b16 %v2034, %v2030
    %v2083 = vpack.c.b16 %v2039, %v2035
    %v2084 = vpack.c.b16 %v2040, %v2036
    %v2085 = vpack.c.b16 %v2041, %v2037
    %v2086 = vpack.c.b16 %v2042, %v2038
    %v2087 = vpack.c.b16 %v2047, %v2043
    %v2088 = vpack.c.b16 %v2048, %v2044
    %v2089 = vpack.c.b16 %v2049, %v2045
    %v2090 = vpack.c.b16 %v2050, %v2046
    %v2091 = vpack.c.b16 %v2055, %v2051
    %v2092 = vpack.c.b16 %v2056, %v2052
    %v2093 = vpack.c.b16 %v2057, %v2053
    %v2094 = vpack.c.b16 %v2058, %v2054
    %v2095 = vpack.c.b16 %v2063, %v2059
    %v2096 = vpack.c.b16 %v2064, %v2060
    %v2097 = vpack.c.b16 %v2065, %v2061
    %v2098 = vpack.c.b16 %v2066, %v2062
    %2131 = vmatprep.subr.bf16.mxu0 %v2068
    %2132 = vmatpush1.bf16.msra.mxu0 %v2067
    %2133 = vmatprep.subr.bf16.mxu0 %v2072
    %2134 = vmatpush1.bf16.msra.mxu0 %v2071
    %2135 = vmatprep.subr.bf16.mxu0 %v2076
    %2136 = vmatpush1.bf16.msra.mxu0 %v2075
    %2137 = vmatprep.subr.bf16.mxu0 %v2080
    %2138 = vmatpush1.bf16.msra.mxu0 %v2079
    %2139 = vmatprep.subr.bf16.mxu0 %v2084
    %2140 = vmatpush1.bf16.msra.mxu0 %v2083
    %2141 = vmatprep.subr.bf16.mxu0 %v2088
    %2142 = vmatpush1.bf16.msra.mxu0 %v2087
    %2143 = vmatprep.subr.bf16.mxu0 %v2092
    %2144 = vmatpush1.bf16.msra.mxu0 %v2091
    %2145 = vmatprep.subr.bf16.mxu0 %v2096
    %2146 = vmatpush1.bf16.msra.mxu0 %v2095
    %2147 = vmatprep.subr.bf16.mxu0 0
    %2148 = vmatpush1.bf16.msra.mxu0 0
    %2149 = vmatprep.subr.bf16.mxu0 0
    %2150 = vmatpush1.bf16.msra.mxu0 0
    %2151 = vmatprep.subr.bf16.mxu0 0
    %2152 = vmatpush1.bf16.msra.mxu0 0
    %2153 = vmatprep.subr.bf16.mxu0 0
    %2154 = vmatpush1.bf16.msra.mxu0 0
    %2155 = vmatprep.subr.bf16.mxu0 0
    %2156 = vmatpush1.bf16.msra.mxu0 0
    %2157 = vmatprep.subr.bf16.mxu0 0
    %2158 = vmatpush1.bf16.msra.mxu0 0
    %2159 = vmatprep.subr.bf16.mxu0 0
    %2160 = vmatpush1.bf16.msra.mxu0 0
    %2161 = vmatprep.subr.bf16.mxu0 0
    %2162 = vmatpush1.bf16.msra.mxu0 0
    %2163 = vmatprep.mubr.bf16.mxu0 0
    %2164 = vmatmul.mubr.bf16.gmra.mrb[0].mxu0 %v1938
    %v2165 = vpop.f32.mrb[0].mxu0
    %v2166 = vadd.f32 0.0, %v2165
    %v2167 = vpop.f32.mrb[0].mxu0
    %v2168 = vadd.f32 0.0, %v2167
    %v2169 = vpop.f32.mrb[0].mxu0
    %v2170 = vpop.f32.mrb[0].mxu0
    %2171 = vdwg.mxu0
    %2172 = vmatprep.subr.bf16.mxu0 %v2070
    %2173 = vmatpush1.bf16.msra.mxu0 %v2069
    %2174 = vmatprep.subr.bf16.mxu0 %v2074
    %2175 = vmatpush1.bf16.msra.mxu0 %v2073
    %2176 = vmatprep.subr.bf16.mxu0 %v2078
    %2177 = vmatpush1.bf16.msra.mxu0 %v2077
    %2178 = vmatprep.subr.bf16.mxu0 %v2082
    %2179 = vmatpush1.bf16.msra.mxu0 %v2081
    %2180 = vmatprep.subr.bf16.mxu0 %v2086
    %2181 = vmatpush1.bf16.msra.mxu0 %v2085
    %2182 = vmatprep.subr.bf16.mxu0 %v2090
    %2183 = vmatpush1.bf16.msra.mxu0 %v2089
    %2184 = vmatprep.subr.bf16.mxu0 %v2094
    %2185 = vmatpush1.bf16.msra.mxu0 %v2093
    %2186 = vmatprep.subr.bf16.mxu0 %v2098
    %2187 = vmatpush1.bf16.msra.mxu0 %v2097
    %2188 = vmatprep.subr.bf16.mxu0 0
    %2189 = vmatpush1.bf16.msra.mxu0 0
    %2190 = vmatprep.subr.bf16.mxu0 0
    %2191 = vmatpush1.bf16.msra.mxu0 0
    %2192 = vmatprep.subr.bf16.mxu0 0
    %2193 = vmatpush1.bf16.msra.mxu0 0
    %2194 = vmatprep.subr.bf16.mxu0 0
    %2195 = vmatpush1.bf16.msra.mxu0 0
    %2196 = vmatprep.subr.bf16.mxu0 0
    %2197 = vmatpush1.bf16.msra.mxu0 0
    %2198 = vmatprep.subr.bf16.mxu0 0
    %2199 = vmatpush1.bf16.msra.mxu0 0
    %2200 = vmatprep.subr.bf16.mxu0 0
    %2201 = vmatpush1.bf16.msra.mxu0 0
    %2202 = vmatprep.subr.bf16.mxu0 0
    %2203 = vmatpush1.bf16.msra.mxu0 0
    %2204 = vmatprep.mubr.bf16.mxu0 0
    %2205 = vmatmul.mubr.bf16.gmra.mrb[0].mxu0 %v1938
    %v2206 = vpop.f32.mrb[0].mxu0
    %v2207 = vadd.f32 0.0, %v2206
    %v2208 = vpop.f32.mrb[0].mxu0
    %v2209 = vadd.f32 0.0, %v2208
    %v2210 = vpop.f32.mrb[0].mxu0
    %v2211 = vpop.f32.mrb[0].mxu0
    %2212 = vdwg.mxu0
    %s2213 = smul.u32 6, 2
    %s2214 = smul.addr %s2213, 8
    %s2215 = scalar_lea.vmem [#allocation2], %s2214
    %v2216 = vld [vmem:[%s2215] sm:$0xff]
    %v2217 = vld [vmem:[%s2215 + $0x8] sm:$0xff]
    %v2218 = vadd.f32 %v2166, %v2216
    %v2219 = vadd.f32 %v2168, %v2217
    %v2220 = vtanh.pop %v2218
    %v2221 = vtanh.pop %v2219
    %v2222 = vmul.f32 %v2220, 0.5
    %v2223 = vmul.f32 %v2221, 0.5
    %v2224 = vadd.f32 %v2222, 0.5
    %v2225 = vadd.f32 %v2223, 0.5
    %v2226 = vmul.f32 %v2224, %v1899
    %2228 = vrot.lane.b32.xlu0 %v2221, 64
    %v2229 = vpop.permute.xlu0 %2228
    %v2231 = vmul.f32 %v2224, %v2229
    %2233 = vrot.lane.b32.xlu0 %v2231, 64
    %v2234 = vpop.permute.xlu0 %2233
    %v2236 = vadd.f32 %v2226, %v2234
    %v2237 = vtanh.pop %v2236
    %2239 = vrot.lane.b32.xlu0 %v2237, 64
    %v2240 = vpop.permute.xlu0 %2239
    %v2242 = vmul.f32 %v2225, %v2240
    %v2243 = vadd.f32 %v2207, %v225
    %v2244 = vadd.f32 %v2209, %v226
    %v2245 = vtanh.pop %v2243
    %v2246 = vtanh.pop %v2244
    %v2247 = vmul.f32 %v2245, 0.5
    %v2248 = vmul.f32 %v2246, 0.5
    %v2249 = vadd.f32 %v2247, 0.5
    %v2250 = vadd.f32 %v2248, 0.5
    %v2251 = vmul.f32 %v2249, %v1924
    %2253 = vrot.lane.b32.xlu0 %v2246, 64
    %v2254 = vpop.permute.xlu0 %2253
    %v2256 = vmul.f32 %v2249, %v2254
    %2258 = vrot.lane.b32.xlu0 %v2256, 64
    %v2259 = vpop.permute.xlu0 %2258
    %v2261 = vadd.f32 %v2251, %v2259
    %v2262 = vtanh.pop %v2261
    %2264 = vrot.lane.b32.xlu0 %v2262, 64
    %v2265 = vpop.permute.xlu0 %2264
    %v2267 = vmul.f32 %v2250, %v2265
    %2269 = vrot.lane.b32.xlu0 %v2267, 64
    %v2270 = vpop.permute.xlu0 %2269
    %v2272 = vsel %vm252, %v2242, %v2270
    %s2273 = scalar_lea.vmem [#allocation6], 40
    %2274 = vst [vmem:[%s2273] sm:$0xff] %v2272
    %v2275 = vpack.c.bf16 %v2272, %v2272
    %v2276 = vld [vmem:[#allocation3] sm:$0xff]
    %v2277 = vld [vmem:[#allocation3 + $0x8] sm:$0xff]
    %v2278 = vld [vmem:[#allocation3 + $0x10] sm:$0xff]
    %v2279 = vld [vmem:[#allocation3 + $0x18] sm:$0xff]
    %v2280 = vld [vmem:[#allocation3 + $0x20] sm:$0xff]
    %v2281 = vld [vmem:[#allocation3 + $0x28] sm:$0xff]
    %v2282 = vld [vmem:[#allocation3 + $0x30] sm:$0xff]
    %v2283 = vld [vmem:[#allocation3 + $0x38] sm:$0xff]
    %v2284 = vld [vmem:[#allocation3 + $0x40] sm:$0xff]
    %v2285 = vld [vmem:[#allocation3 + $0x48] sm:$0xff]
    %v2286 = vld [vmem:[#allocation3 + $0x50] sm:$0xff]
    %v2287 = vld [vmem:[#allocation3 + $0x58] sm:$0xff]
    %v2288 = vld [vmem:[#allocation3 + $0x60] sm:$0xff]
    %v2289 = vld [vmem:[#allocation3 + $0x68] sm:$0xff]
    %v2290 = vld [vmem:[#allocation3 + $0x70] sm:$0xff]
    %v2291 = vld [vmem:[#allocation3 + $0x78] sm:$0xff]
    %v2292 = vld [vmem:[#allocation3 + $0x80] sm:$0xff]
    %v2293 = vld [vmem:[#allocation3 + $0x88] sm:$0xff]
    %v2294 = vld [vmem:[#allocation3 + $0x90] sm:$0xff]
    %v2295 = vld [vmem:[#allocation3 + $0x98] sm:$0xff]
    %v2296 = vld [vmem:[#allocation3 + $0xa0] sm:$0xff]
    %v2297 = vld [vmem:[#allocation3 + $0xa8] sm:$0xff]
    %v2298 = vld [vmem:[#allocation3 + $0xb0] sm:$0xff]
    %v2299 = vld [vmem:[#allocation3 + $0xb8] sm:$0xff]
    %v2300 = vld [vmem:[#allocation3 + $0xc0] sm:$0xff]
    %v2301 = vld [vmem:[#allocation3 + $0xc8] sm:$0xff]
    %v2302 = vld [vmem:[#allocation3 + $0xd0] sm:$0xff]
    %v2303 = vld [vmem:[#allocation3 + $0xd8] sm:$0xff]
    %v2304 = vld [vmem:[#allocation3 + $0xe0] sm:$0xff]
    %v2305 = vld [vmem:[#allocation3 + $0xe8] sm:$0xff]
    %v2306 = vld [vmem:[#allocation3 + $0xf0] sm:$0xff]
    %v2307 = vld [vmem:[#allocation3 + $0xf8] sm:$0xff]
    %v2340 = vunpack.c.l.b16 %v2276
    %v2341 = vunpack.c.h.b16 %v2276
    %v2342 = vunpack.c.l.b16 %v2277
    %v2343 = vunpack.c.h.b16 %v2277
    %v2344 = vunpack.c.l.b16 %v2278
    %v2345 = vunpack.c.h.b16 %v2278
    %v2346 = vunpack.c.l.b16 %v2279
    %v2347 = vunpack.c.h.b16 %v2279
    %v2348 = vunpack.c.l.b16 %v2280
    %v2349 = vunpack.c.h.b16 %v2280
    %v2350 = vunpack.c.l.b16 %v2281
    %v2351 = vunpack.c.h.b16 %v2281
    %v2352 = vunpack.c.l.b16 %v2282
    %v2353 = vunpack.c.h.b16 %v2282
    %v2354 = vunpack.c.l.b16 %v2283
    %v2355 = vunpack.c.h.b16 %v2283
    %v2356 = vunpack.c.l.b16 %v2284
    %v2357 = vunpack.c.h.b16 %v2284
    %v2358 = vunpack.c.l.b16 %v2285
    %v2359 = vunpack.c.h.b16 %v2285
    %v2360 = vunpack.c.l.b16 %v2286
    %v2361 = vunpack.c.h.b16 %v2286
    %v2362 = vunpack.c.l.b16 %v2287
    %v2363 = vunpack.c.h.b16 %v2287
    %v2364 = vunpack.c.l.b16 %v2288
    %v2365 = vunpack.c.h.b16 %v2288
    %v2366 = vunpack.c.l.b16 %v2289
    %v2367 = vunpack.c.h.b16 %v2289
    %v2368 = vunpack.c.l.b16 %v2290
    %v2369 = vunpack.c.h.b16 %v2290
    %v2370 = vunpack.c.l.b16 %v2291
    %v2371 = vunpack.c.h.b16 %v2291
    %v2372 = vunpack.c.l.b16 %v2292
    %v2373 = vunpack.c.h.b16 %v2292
    %v2374 = vunpack.c.l.b16 %v2293
    %v2375 = vunpack.c.h.b16 %v2293
    %v2376 = vunpack.c.l.b16 %v2294
    %v2377 = vunpack.c.h.b16 %v2294
    %v2378 = vunpack.c.l.b16 %v2295
    %v2379 = vunpack.c.h.b16 %v2295
    %v2380 = vunpack.c.l.b16 %v2296
    %v2381 = vunpack.c.h.b16 %v2296
    %v2382 = vunpack.c.l.b16 %v2297
    %v2383 = vunpack.c.h.b16 %v2297
    %v2384 = vunpack.c.l.b16 %v2298
    %v2385 = vunpack.c.h.b16 %v2298
    %v2386 = vunpack.c.l.b16 %v2299
    %v2387 = vunpack.c.h.b16 %v2299
    %v2388 = vunpack.c.l.b16 %v2300
    %v2389 = vunpack.c.h.b16 %v2300
    %v2390 = vunpack.c.l.b16 %v2301
    %v2391 = vunpack.c.h.b16 %v2301
    %v2392 = vunpack.c.l.b16 %v2302
    %v2393 = vunpack.c.h.b16 %v2302
    %v2394 = vunpack.c.l.b16 %v2303
    %v2395 = vunpack.c.h.b16 %v2303
    %v2396 = vunpack.c.l.b16 %v2304
    %v2397 = vunpack.c.h.b16 %v2304
    %v2398 = vunpack.c.l.b16 %v2305
    %v2399 = vunpack.c.h.b16 %v2305
    %v2400 = vunpack.c.l.b16 %v2306
    %v2401 = vunpack.c.h.b16 %v2306
    %v2402 = vunpack.c.l.b16 %v2307
    %v2403 = vunpack.c.h.b16 %v2307
    %v2404 = vpack.c.b16 %v2344, %v2340
    %v2405 = vpack.c.b16 %v2345, %v2341
    %v2406 = vpack.c.b16 %v2346, %v2342
    %v2407 = vpack.c.b16 %v2347, %v2343
    %v2408 = vpack.c.b16 %v2352, %v2348
    %v2409 = vpack.c.b16 %v2353, %v2349
    %v2410 = vpack.c.b16 %v2354, %v2350
    %v2411 = vpack.c.b16 %v2355, %v2351
    %v2412 = vpack.c.b16 %v2360, %v2356
    %v2413 = vpack.c.b16 %v2361, %v2357
    %v2414 = vpack.c.b16 %v2362, %v2358
    %v2415 = vpack.c.b16 %v2363, %v2359
    %v2416 = vpack.c.b16 %v2368, %v2364
    %v2417 = vpack.c.b16 %v2369, %v2365
    %v2418 = vpack.c.b16 %v2370, %v2366
    %v2419 = vpack.c.b16 %v2371, %v2367
    %v2420 = vpack.c.b16 %v2376, %v2372
    %v2421 = vpack.c.b16 %v2377, %v2373
    %v2422 = vpack.c.b16 %v2378, %v2374
    %v2423 = vpack.c.b16 %v2379, %v2375
    %v2424 = vpack.c.b16 %v2384, %v2380
    %v2425 = vpack.c.b16 %v2385, %v2381
    %v2426 = vpack.c.b16 %v2386, %v2382
    %v2427 = vpack.c.b16 %v2387, %v2383
    %v2428 = vpack.c.b16 %v2392, %v2388
    %v2429 = vpack.c.b16 %v2393, %v2389
    %v2430 = vpack.c.b16 %v2394, %v2390
    %v2431 = vpack.c.b16 %v2395, %v2391
    %v2432 = vpack.c.b16 %v2400, %v2396
    %v2433 = vpack.c.b16 %v2401, %v2397
    %v2434 = vpack.c.b16 %v2402, %v2398
    %v2435 = vpack.c.b16 %v2403, %v2399
    %2468 = vmatprep.subr.bf16.mxu0 %v2405
    %2469 = vmatpush1.bf16.msra.mxu0 %v2404
    %2470 = vmatprep.subr.bf16.mxu0 %v2409
    %2471 = vmatpush1.bf16.msra.mxu0 %v2408
    %2472 = vmatprep.subr.bf16.mxu0 %v2413
    %2473 = vmatpush1.bf16.msra.mxu0 %v2412
    %2474 = vmatprep.subr.bf16.mxu0 %v2417
    %2475 = vmatpush1.bf16.msra.mxu0 %v2416
    %2476 = vmatprep.subr.bf16.mxu0 %v2421
    %2477 = vmatpush1.bf16.msra.mxu0 %v2420
    %2478 = vmatprep.subr.bf16.mxu0 %v2425
    %2479 = vmatpush1.bf16.msra.mxu0 %v2424
    %2480 = vmatprep.subr.bf16.mxu0 %v2429
    %2481 = vmatpush1.bf16.msra.mxu0 %v2428
    %2482 = vmatprep.subr.bf16.mxu0 %v2433
    %2483 = vmatpush1.bf16.msra.mxu0 %v2432
    %2484 = vmatprep.subr.bf16.mxu0 0
    %2485 = vmatpush1.bf16.msra.mxu0 0
    %2486 = vmatprep.subr.bf16.mxu0 0
    %2487 = vmatpush1.bf16.msra.mxu0 0
    %2488 = vmatprep.subr.bf16.mxu0 0
    %2489 = vmatpush1.bf16.msra.mxu0 0
    %2490 = vmatprep.subr.bf16.mxu0 0
    %2491 = vmatpush1.bf16.msra.mxu0 0
    %2492 = vmatprep.subr.bf16.mxu0 0
    %2493 = vmatpush1.bf16.msra.mxu0 0
    %2494 = vmatprep.subr.bf16.mxu0 0
    %2495 = vmatpush1.bf16.msra.mxu0 0
    %2496 = vmatprep.subr.bf16.mxu0 0
    %2497 = vmatpush1.bf16.msra.mxu0 0
    %2498 = vmatprep.subr.bf16.mxu0 0
    %2499 = vmatpush1.bf16.msra.mxu0 0
    %2500 = vmatprep.mubr.bf16.mxu0 0
    %2501 = vmatmul.mubr.bf16.gmra.mrb[0].mxu0 %v2275
    %v2502 = vpop.f32.mrb[0].mxu0
    %v2503 = vadd.f32 0.0, %v2502
    %v2504 = vpop.f32.mrb[0].mxu0
    %v2505 = vadd.f32 0.0, %v2504
    %v2506 = vpop.f32.mrb[0].mxu0
    %v2507 = vpop.f32.mrb[0].mxu0
    %2508 = vdwg.mxu0
    %2509 = vmatprep.subr.bf16.mxu0 %v2407
    %2510 = vmatpush1.bf16.msra.mxu0 %v2406
    %2511 = vmatprep.subr.bf16.mxu0 %v2411
    %2512 = vmatpush1.bf16.msra.mxu0 %v2410
    %2513 = vmatprep.subr.bf16.mxu0 %v2415
    %2514 = vmatpush1.bf16.msra.mxu0 %v2414
    %2515 = vmatprep.subr.bf16.mxu0 %v2419
    %2516 = vmatpush1.bf16.msra.mxu0 %v2418
    %2517 = vmatprep.subr.bf16.mxu0 %v2423
    %2518 = vmatpush1.bf16.msra.mxu0 %v2422
    %2519 = vmatprep.subr.bf16.mxu0 %v2427
    %2520 = vmatpush1.bf16.msra.mxu0 %v2426
    %2521 = vmatprep.subr.bf16.mxu0 %v2431
    %2522 = vmatpush1.bf16.msra.mxu0 %v2430
    %2523 = vmatprep.subr.bf16.mxu0 %v2435
    %2524 = vmatpush1.bf16.msra.mxu0 %v2434
    %2525 = vmatprep.subr.bf16.mxu0 0
    %2526 = vmatpush1.bf16.msra.mxu0 0
    %2527 = vmatprep.subr.bf16.mxu0 0
    %2528 = vmatpush1.bf16.msra.mxu0 0
    %2529 = vmatprep.subr.bf16.mxu0 0
    %2530 = vmatpush1.bf16.msra.mxu0 0
    %2531 = vmatprep.subr.bf16.mxu0 0
    %2532 = vmatpush1.bf16.msra.mxu0 0
    %2533 = vmatprep.subr.bf16.mxu0 0
    %2534 = vmatpush1.bf16.msra.mxu0 0
    %2535 = vmatprep.subr.bf16.mxu0 0
    %2536 = vmatpush1.bf16.msra.mxu0 0
    %2537 = vmatprep.subr.bf16.mxu0 0
    %2538 = vmatpush1.bf16.msra.mxu0 0
    %2539 = vmatprep.subr.bf16.mxu0 0
    %2540 = vmatpush1.bf16.msra.mxu0 0
    %2541 = vmatprep.mubr.bf16.mxu0 0
    %2542 = vmatmul.mubr.bf16.gmra.mrb[0].mxu0 %v2275
    %v2543 = vpop.f32.mrb[0].mxu0
    %v2544 = vadd.f32 0.0, %v2543
    %v2545 = vpop.f32.mrb[0].mxu0
    %v2546 = vadd.f32 0.0, %v2545
    %v2547 = vpop.f32.mrb[0].mxu0
    %v2548 = vpop.f32.mrb[0].mxu0
    %2549 = vdwg.mxu0
    %s2550 = smul.u32 7, 2
    %s2551 = smul.addr %s2550, 8
    %s2552 = scalar_lea.vmem [#allocation2], %s2551
    %v2553 = vld [vmem:[%s2552] sm:$0xff]
    %v2554 = vld [vmem:[%s2552 + $0x8] sm:$0xff]
    %v2555 = vadd.f32 %v2503, %v2553
    %v2556 = vadd.f32 %v2505, %v2554
    %v2557 = vtanh.pop %v2555
    %v2558 = vtanh.pop %v2556
    %v2559 = vmul.f32 %v2557, 0.5
    %v2560 = vmul.f32 %v2558, 0.5
    %v2561 = vadd.f32 %v2559, 0.5
    %v2562 = vadd.f32 %v2560, 0.5
    %v2563 = vmul.f32 %v2561, %v2236
    %2565 = vrot.lane.b32.xlu0 %v2558, 64
    %v2566 = vpop.permute.xlu0 %2565
    %v2568 = vmul.f32 %v2561, %v2566
    %2570 = vrot.lane.b32.xlu0 %v2568, 64
    %v2571 = vpop.permute.xlu0 %2570
    %v2573 = vadd.f32 %v2563, %v2571
    %v2574 = vtanh.pop %v2573
    %2576 = vrot.lane.b32.xlu0 %v2574, 64
    %v2577 = vpop.permute.xlu0 %2576
    %v2579 = vmul.f32 %v2562, %v2577
    %v2580 = vadd.f32 %v2544, %v225
    %v2581 = vadd.f32 %v2546, %v226
    %v2582 = vtanh.pop %v2580
    %v2583 = vtanh.pop %v2581
    %v2584 = vmul.f32 %v2582, 0.5
    %v2585 = vmul.f32 %v2583, 0.5
    %v2586 = vadd.f32 %v2584, 0.5
    %v2587 = vadd.f32 %v2585, 0.5
    %v2588 = vmul.f32 %v2586, %v2261
    %2590 = vrot.lane.b32.xlu0 %v2583, 64
    %v2591 = vpop.permute.xlu0 %2590
    %v2593 = vmul.f32 %v2586, %v2591
    %2595 = vrot.lane.b32.xlu0 %v2593, 64
    %v2596 = vpop.permute.xlu0 %2595
    %v2598 = vadd.f32 %v2588, %v2596
    %v2599 = vtanh.pop %v2598
    %2601 = vrot.lane.b32.xlu0 %v2599, 64
    %v2602 = vpop.permute.xlu0 %2601
    %v2604 = vmul.f32 %v2587, %v2602
    %2606 = vrot.lane.b32.xlu0 %v2604, 64
    %v2607 = vpop.permute.xlu0 %2606
    %v2609 = vsel %vm252, %v2579, %v2607
    %s2610 = scalar_lea.vmem [#allocation6], 48
    %2611 = vst [vmem:[%s2610] sm:$0xff] %v2609
    %v2612 = vpack.c.bf16 %v2609, %v2609
    %v2613 = vld [vmem:[#allocation3 + $0x8] sm:$0xff]
    %v2614 = vld [vmem:[#allocation3 + $0x18] sm:$0xff]
    %v2615 = vld [vmem:[#allocation3 + $0x28] sm:$0xff]
    %v2616 = vld [vmem:[#allocation3 + $0x38] sm:$0xff]
    %v2617 = vld [vmem:[#allocation3 + $0x48] sm:$0xff]
    %v2618 = vld [vmem:[#allocation3 + $0x58] sm:$0xff]
    %v2619 = vld [vmem:[#allocation3 + $0x68] sm:$0xff]
    %v2620 = vld [vmem:[#allocation3 + $0x78] sm:$0xff]
    %v2621 = vld [vmem:[#allocation3 + $0x88] sm:$0xff]
    %v2622 = vld [vmem:[#allocation3 + $0x98] sm:$0xff]
    %v2623 = vld [vmem:[#allocation3 + $0xa8] sm:$0xff]
    %v2624 = vld [vmem:[#allocation3 + $0xb8] sm:$0xff]
    %v2625 = vld [vmem:[#allocation3 + $0xc8] sm:$0xff]
    %v2626 = vld [vmem:[#allocation3 + $0xd8] sm:$0xff]
    %v2627 = vld [vmem:[#allocation3 + $0xe8] sm:$0xff]
    %v2628 = vld [vmem:[#allocation3 + $0xf8] sm:$0xff]
    %v2645 = vunpack.c.l.b16 %v2613
    %v2646 = vunpack.c.h.b16 %v2613
    %v2647 = vunpack.c.l.b16 %v2614
    %v2648 = vunpack.c.h.b16 %v2614
    %v2649 = vunpack.c.l.b16 %v2615
    %v2650 = vunpack.c.h.b16 %v2615
    %v2651 = vunpack.c.l.b16 %v2616
    %v2652 = vunpack.c.h.b16 %v2616
    %v2653 = vunpack.c.l.b16 %v2617
    %v2654 = vunpack.c.h.b16 %v2617
    %v2655 = vunpack.c.l.b16 %v2618
    %v2656 = vunpack.c.h.b16 %v2618
    %v2657 = vunpack.c.l.b16 %v2619
    %v2658 = vunpack.c.h.b16 %v2619
    %v2659 = vunpack.c.l.b16 %v2620
    %v2660 = vunpack.c.h.b16 %v2620
    %v2661 = vunpack.c.l.b16 %v2621
    %v2662 = vunpack.c.h.b16 %v2621
    %v2663 = vunpack.c.l.b16 %v2622
    %v2664 = vunpack.c.h.b16 %v2622
    %v2665 = vunpack.c.l.b16 %v2623
    %v2666 = vunpack.c.h.b16 %v2623
    %v2667 = vunpack.c.l.b16 %v2624
    %v2668 = vunpack.c.h.b16 %v2624
    %v2669 = vunpack.c.l.b16 %v2625
    %v2670 = vunpack.c.h.b16 %v2625
    %v2671 = vunpack.c.l.b16 %v2626
    %v2672 = vunpack.c.h.b16 %v2626
    %v2673 = vunpack.c.l.b16 %v2627
    %v2674 = vunpack.c.h.b16 %v2627
    %v2675 = vunpack.c.l.b16 %v2628
    %v2676 = vunpack.c.h.b16 %v2628
    %v2677 = vpack.c.b16 %v2647, %v2645
    %v2678 = vpack.c.b16 %v2648, %v2646
    %v2679 = vpack.c.b16 %v2651, %v2649
    %v2680 = vpack.c.b16 %v2652, %v2650
    %v2681 = vpack.c.b16 %v2655, %v2653
    %v2682 = vpack.c.b16 %v2656, %v2654
    %v2683 = vpack.c.b16 %v2659, %v2657
    %v2684 = vpack.c.b16 %v2660, %v2658
    %v2685 = vpack.c.b16 %v2663, %v2661
    %v2686 = vpack.c.b16 %v2664, %v2662
    %v2687 = vpack.c.b16 %v2667, %v2665
    %v2688 = vpack.c.b16 %v2668, %v2666
    %v2689 = vpack.c.b16 %v2671, %v2669
    %v2690 = vpack.c.b16 %v2672, %v2670
    %v2691 = vpack.c.b16 %v2675, %v2673
    %v2692 = vpack.c.b16 %v2676, %v2674
    %2709 = vmatprep.subr.bf16.mxu0 %v2678
    %2710 = vmatpush1.bf16.msra.mxu0 %v2677
    %2711 = vmatprep.subr.bf16.mxu0 %v2680
    %2712 = vmatpush1.bf16.msra.mxu0 %v2679
    %2713 = vmatprep.subr.bf16.mxu0 %v2682
    %2714 = vmatpush1.bf16.msra.mxu0 %v2681
    %2715 = vmatprep.subr.bf16.mxu0 %v2684
    %2716 = vmatpush1.bf16.msra.mxu0 %v2683
    %2717 = vmatprep.subr.bf16.mxu0 %v2686
    %2718 = vmatpush1.bf16.msra.mxu0 %v2685
    %2719 = vmatprep.subr.bf16.mxu0 %v2688
    %2720 = vmatpush1.bf16.msra.mxu0 %v2687
    %2721 = vmatprep.subr.bf16.mxu0 %v2690
    %2722 = vmatpush1.bf16.msra.mxu0 %v2689
    %2723 = vmatprep.subr.bf16.mxu0 %v2692
    %2724 = vmatpush1.bf16.msra.mxu0 %v2691
    %2725 = vmatprep.subr.bf16.mxu0 0
    %2726 = vmatpush1.bf16.msra.mxu0 0
    %2727 = vmatprep.subr.bf16.mxu0 0
    %2728 = vmatpush1.bf16.msra.mxu0 0
    %2729 = vmatprep.subr.bf16.mxu0 0
    %2730 = vmatpush1.bf16.msra.mxu0 0
    %2731 = vmatprep.subr.bf16.mxu0 0
    %2732 = vmatpush1.bf16.msra.mxu0 0
    %2733 = vmatprep.subr.bf16.mxu0 0
    %2734 = vmatpush1.bf16.msra.mxu0 0
    %2735 = vmatprep.subr.bf16.mxu0 0
    %2736 = vmatpush1.bf16.msra.mxu0 0
    %2737 = vmatprep.subr.bf16.mxu0 0
    %2738 = vmatpush1.bf16.msra.mxu0 0
    %2739 = vmatprep.subr.bf16.mxu0 0
    %2740 = vmatpush1.bf16.msra.mxu0 0
    %2741 = vmatprep.mubr.bf16.mxu0 0
    %2742 = vmatmul.mubr.bf16.gmra.mrb[0].mxu0 %v2612
    %v2743 = vpop.f32.mrb[0].mxu0
    %v2744 = vadd.f32 %v225, %v2743
    %v2745 = vpop.f32.mrb[0].mxu0
    %v2746 = vadd.f32 %v226, %v2745
    %v2747 = vpop.f32.mrb[0].mxu0
    %v2748 = vpop.f32.mrb[0].mxu0
    %2749 = vdwg.mxu0
    %v2750 = vtanh.pop %v2744
    %v2751 = vtanh.pop %v2746
    %v2752 = vmul.f32 %v2750, 0.5
    %v2753 = vmul.f32 %v2751, 0.5
    %v2754 = vadd.f32 %v2752, 0.5
    %v2755 = vadd.f32 %v2753, 0.5
    %v2756 = vmul.f32 %v2754, %v2598
    %2758 = vrot.lane.b32.xlu0 %v2751, 64
    %v2759 = vpop.permute.xlu0 %2758
    %v2761 = vmul.f32 %v2754, %v2759
    %2763 = vrot.lane.b32.xlu0 %v2761, 64
    %v2764 = vpop.permute.xlu0 %2763
    %v2766 = vadd.f32 %v2756, %v2764
    %v2767 = vtanh.pop %v2766
    %2769 = vrot.lane.b32.xlu0 %v2767, 64
    %v2770 = vpop.permute.xlu0 %2769
    %v2772 = vmul.f32 %v2755, %v2770
    %2774 = vrot.lane.b32.xlu0 %v2772, 64
    %v2775 = vpop.permute.xlu0 %2774
    %v2777 = vsel %vm252, %v2609, %v2775
    %2778 = vst [vmem:[#allocation6 + $0x38] sm:$0xff] %v2777
    // Predicated region
    $region26: #{tpu_custom_call.1} parent=1 // pred_check
      _
    $region27: #{tpu_custom_call.1} parent=1 // pred_check_branch
      %2780 = sbr.rel (0) target = $region29
    $region28: #{tpu_custom_call.1} parent=1 // pred_region
      %s2782 = ssub.s32 1024, 1024
      %2783 = vsyncadd [#allocation5], %s2782
      %s2784 = sshll.u32 [#allocation6], 4
      %s2785 = int_to_ptr.vmem [resolvable:$true] %s2784
      %2790 = dma.vmem_to_hbm [thread:$0]  %s2785, 1024, %s5, [#allocation5], 128, 128, 8
    $region29: #{tpu_custom_call.1} parent=1 // pred_fallthru
      _
    // Predicated region
    $region30: #{tpu_custom_call.1} parent=1 // pred_check
      _
    $region31: #{tpu_custom_call.1} parent=1 // pred_check_branch
      %2792 = sbr.rel (0) target = $region33
    $region32: #{tpu_custom_call.1} parent=1 // pred_region
      %2793 = dma.done [#allocation5], 1024
    $region33: #{tpu_custom_call.1} parent=1 // pred_fallthru
      _
    %2794 = vsyncpa [#allocation4], 1
    %2795 = vsyncpa [#allocation5], 1

</llo_original>
